<compile_context>
chip_gen: v7x
topology: tpu7x:2x2x1
jax: 0.10.0
libtpu: 0.0.40
codegen_flags: <defaults>
</compile_context>

<pallas_src>
import jax
import jax.numpy as jnp
import numpy as np
from jax.experimental import pallas as pl
from jax.experimental.pallas import tpu as pltpu

BN_EPS = 1e-5


# ---------------------------------------------------------------------------
# Fused Pallas kernel (whole forward pass)
# ---------------------------------------------------------------------------
def _bn_relu(y, g, b):
    """Training-mode BatchNorm (batch stats over rows) + ReLU, all in f32."""
    mean = jnp.mean(y, axis=0, keepdims=True)
    d = y - mean                                    # computed once, reused
    var = jnp.mean(d * d, axis=0, keepdims=True)    # biased variance
    return jnp.maximum(d * jax.lax.rsqrt(var + BN_EPS) * g + b, 0.0)


def make_fused_forward(*, N, H1, W1, ker, cin, c1, c2, bddim,
                       hidden_dim, middle_hidden, cat_num, bs1):
    H2, W2 = H1 // 2, W1 // 2
    H3, W3 = H2 // 2, W2 // 2
    M1, M2, M3 = N * H1 * W1, N * H2 * W2, N * H3 * W3
    K1 = ker * ker * cin
    HW3 = H3 * W3
    bs2 = N

    def kernel(p_ref, w1_ref, g1_ref, bb1_ref,
               w2_ref, g2_ref, bb2_ref,
               w3_ref, g3_ref, bb3_ref,
               z1_ref, fa_ref, fb_ref, f1b_ref, f2w_ref, f2b_ref,
               o_ref):
        # conv1 (ker x ker, stride ker) as im2col matmul, fused BN + ReLU.
        y1 = _bn_relu(
            jnp.dot(p_ref[...], w1_ref[...], preferred_element_type=jnp.float32),
            g1_ref[...], bb1_ref[...])                               # (M1, c1) f32
        # conv2 (1x1, stride 2): rows [0, M2) are exactly the ::2,::2 positions.
        y2 = _bn_relu(
            jnp.dot(y1[:M2].astype(jnp.bfloat16), w2_ref[...],
                    preferred_element_type=jnp.float32),
            g2_ref[...], bb2_ref[...])                               # (M2, c2)
        # conv3 (1x1, stride 2): rows [0, M3) are the ::4,::4 positions,
        # contiguous per image in (n, h3, w3) order.
        y3 = _bn_relu(
            jnp.dot(y2[:M3].astype(jnp.bfloat16), w3_ref[...],
                    preferred_element_type=jnp.float32),
            g3_ref[...], bb3_ref[...])                               # (M3, bddim)

        # AdaptiveAvgPool(1,1) feature = per-image per-channel spatial VARIANCE:
        #   feat = pool_avg((y3 - pool_avg(y3))**2)
        y3r = y3.reshape(N, HW3, bddim)
        m = jnp.mean(y3r, axis=1, keepdims=True)
        dd = y3r - m
        feat = jnp.mean(dd * dd, axis=1)                             # (bs2, bddim)

        # test=True head (kept f32 - negligible FLOPs):
        #   fc1(cat(z1[i], feat[j])) = z1[i]@Wa + feat[j]@Wb + b1
        #   out[i] = sum_j fc2(relu(.)) = (sum_j relu(.)) @ W2 + bs2*b2
        A = jnp.dot(z1_ref[...], fa_ref[...],
                    preferred_element_type=jnp.float32)              # (bs1, mid)
        B = jnp.dot(feat, fb_ref[...],
                    preferred_element_type=jnp.float32) + f1b_ref[...]  # (bs2, mid)
        h = jnp.maximum(A[:, None, :] + B[None, :, :], 0.0)          # (bs1, bs2, mid)
        S = jnp.sum(h, axis=1)                                       # (bs1, mid)
        o_ref[...] = (jnp.dot(S, f2w_ref[...],
                              preferred_element_type=jnp.float32)
                      + bs2 * f2b_ref[...])

    flops = 2.0 * (M1 * K1 * c1 + M2 * c1 * c2 + M3 * c2 * bddim
                   + bs1 * hidden_dim * middle_hidden
                   + bs2 * bddim * middle_hidden
                   + bs1 * middle_hidden * cat_num)
    bytes_accessed = (2 * (M1 * K1 + K1 * c1 + c1 * c2 + c2 * bddim)      # bf16
                      + 4 * (2 * (c1 + c2 + bddim)
                             + bs1 * hidden_dim
                             + (hidden_dim + bddim) * middle_hidden + middle_hidden
                             + middle_hidden * cat_num + cat_num
                             + bs1 * cat_num))

    def full(shape):
        return pl.BlockSpec(shape, lambda i: (0, 0))   # every operand is 2-D

    return pl.pallas_call(
        kernel,
        out_shape=jax.ShapeDtypeStruct((bs1, cat_num), jnp.float32),
        grid=(1,),
        in_specs=[
            full((M1, K1)), full((K1, c1)), full((1, c1)), full((1, c1)),
            full((c1, c2)), full((1, c2)), full((1, c2)),
            full((c2, bddim)), full((1, bddim)), full((1, bddim)),
            full((bs1, hidden_dim)),
            full((hidden_dim, middle_hidden)), full((bddim, middle_hidden)),
            full((1, middle_hidden)),
            full((middle_hidden, cat_num)), full((1, cat_num)),
        ],
        out_specs=full((bs1, cat_num)),
        compiler_params=pltpu.CompilerParams(
            dimension_semantics=("arbitrary",)),
        cost_estimate=pl.CostEstimate(
            flops=int(flops),
            transcendentals=int(c1 + c2 + bddim),
            bytes_accessed=int(bytes_accessed)),
    )


# ---------------------------------------------------------------------------
# Wrapper: permuted im2col + single fused kernel call
# ---------------------------------------------------------------------------
def fdc_i9_forward(params, z1, z2_nchw, *, ker=4):
    x = jnp.transpose(z2_nchw, (0, 2, 3, 1)).astype(jnp.float32)    # NCHW -> NHWC
    N, H, W, C = x.shape
    assert H % ker == 0 and W % ker == 0
    H1, W1 = H // ker, W // ker
    assert H1 % 4 == 0 and W1 % 4 == 0, "need clean stride-2 x2 downsampling"

    # im2col for the non-overlapping ker x ker / stride-ker conv1, rows permuted:
    #   rows [0, N*H3*W3) : positions with h1%4==0 and w1%4==0  (per-image blocks)
    #   rows [0, N*H2*W2) : positions with h1%2==0 and w1%2==0
    #   rows [0, N*H1*W1) : all positions
    # BN statistics are order invariant, so only the grouping matters; the two
    # stride-2 downsamples become leading-row slices inside the kernel.
    K1 = ker * ker * C
    p = jnp.transpose(x.reshape(N, H1, ker, W1, ker, C), (0, 1, 3, 2, 4, 5))
    p = p.reshape(N, H1, W1, K1)
    p2 = p[:, ::2, ::2, :]
    groups = [
        p2[:, ::2, ::2, :],                                     # conv3-feeding rows
        p2[:, 1::2, ::2, :], p2[:, ::2, 1::2, :], p2[:, 1::2, 1::2, :],
        p[:, 1::2, ::2, :],  p[:, ::2, 1::2, :],  p[:, 1::2, 1::2, :],
    ]
    patches = jnp.concatenate([g.reshape(-1, K1) for g in groups], axis=0)

    c1 = params['conv1_w'].shape[1]
    c2 = params['conv2_w'].shape[1]
    bddim = params['conv3_w'].shape[1]
    hidden_dim, middle_hidden = params['fc1_wa'].shape
    cat_num = params['fc2_w'].shape[1]
    bs1 = z1.shape[0]

    call = make_fused_forward(N=N, H1=H1, W1=W1, ker=ker, cin=C, c1=c1, c2=c2,
                              bddim=bddim, hidden_dim=hidden_dim,
                              middle_hidden=middle_hidden, cat_num=cat_num,
                              bs1=bs1)

    bf = jnp.bfloat16
    return call(
        patches.astype(bf),
        params['conv1_w'].astype(bf),
        params['bn1_g'].reshape(1, c1), params['bn1_b'].reshape(1, c1),
        params['conv2_w'].astype(bf),
        params['bn2_g'].reshape(1, c2), params['bn2_b'].reshape(1, c2),
        params['conv3_w'].astype(bf),
        params['bn3_g'].reshape(1, bddim), params['bn3_b'].reshape(1, bddim),
        z1.astype(jnp.float32),
        params['fc1_wa'], params['fc1_wb'], params['fc1_b'],
        params['fc2_w'], params['fc2_b'],
    )


# ---------------------------------------------------------------------------
# Pure-JAX reference (mirrors the literal PyTorch forward, test=True)
# ---------------------------------------------------------------------------
def reference_forward(params, z1, z2_nchw, *, ker=4):
    hi = jax.lax.Precision.HIGHEST
    x = jnp.transpose(z2_nchw, (0, 2, 3, 1)).astype(jnp.float32)
    N, H, W, C = x.shape
    H1, W1 = H // ker, W // ker
    p = jnp.transpose(x.reshape(N, H1, ker, W1, ker, C), (0, 1, 3, 2, 4, 5))
    p = p.reshape(N, H1, W1, ker * ker * C)

    def cbr(x2d, w, g, b):
        y = jnp.dot(x2d, w, precision=hi)
        mean = jnp.mean(y, axis=0, keepdims=True)
        var = jnp.mean(jnp.square(y - mean), axis=0, keepdims=True)
        y = (y - mean) / jnp.sqrt(var + BN_EPS) * g[None, :] + b[None, :]
        return jnp.maximum(y, 0.0)

    y1 = cbr(p.reshape(N * H1 * W1, -1), params['conv1_w'],
             params['bn1_g'], params['bn1_b']).reshape(N, H1, W1, -1)
    y1s = y1[:, ::2, ::2, :]
    _, H2, W2, C1 = y1s.shape
    y2 = cbr(y1s.reshape(N * H2 * W2, C1), params['conv2_w'],
             params['bn2_g'], params['bn2_b']).reshape(N, H2, W2, -1)
    y2s = y2[:, ::2, ::2, :]
    _, H3, W3, C2 = y2s.shape
    y3 = cbr(y2s.reshape(N * H3 * W3, C2), params['conv3_w'],
             params['bn3_g'], params['bn3_b']).reshape(N, H3, W3, -1)

    m = jnp.mean(y3, axis=(1, 2), keepdims=True)
    feat = jnp.mean(jnp.square(y3 - m), axis=(1, 2))        # spatial variance

    bs1, bs2 = z1.shape[0], feat.shape[0]
    z1r = jnp.repeat(z1[:, None, :], bs2, axis=1)
    z2r = jnp.repeat(feat[None, :, :], bs1, axis=0)
    hh = jnp.concatenate([z1r, z2r], axis=2).reshape(bs1 * bs2, -1)
    W1full = jnp.concatenate([params['fc1_wa'], params['fc1_wb']], axis=0)
    h = jnp.maximum(jnp.dot(hh, W1full, precision=hi) + params['fc1_b'][0], 0.0)
    out = jnp.dot(h, params['fc2_w'], precision=hi) + params['fc2_b'][0]
    return jnp.sum(out.reshape(bs1, bs2, -1), axis=1)


# ---------------------------------------------------------------------------
if __name__ == "__main__":
    key = jax.random.PRNGKey(0)

    # Small but module-consistent hyperparameters (defaults scaled down).
    hidden_dim = 256
    bddim = 128
    middle_hidden = 128
    cat_num = 8
    ker = 4
    bs1, bs2 = 2, 2
    H = W = 64            # conv1 -> 16x16, conv2 -> 8x8, conv3 -> 4x4

    ks = jax.random.split(key, 9)
    params = {
        # conv weights stored as (kh*kw*Cin, Cout) / (Cin, Cout) matmul form
        'conv1_w': 0.1 * jax.random.normal(ks[0], (ker * ker * 3, 32), jnp.float32),
        'conv2_w': 0.1 * jax.random.normal(ks[1], (32, 64), jnp.float32),
        'conv3_w': 0.1 * jax.random.normal(ks[2], (64, bddim), jnp.float32),
        'bn1_g': jnp.ones((32,), jnp.float32),    'bn1_b': jnp.zeros((32,), jnp.float32),
        'bn2_g': jnp.ones((64,), jnp.float32),    'bn2_b': jnp.zeros((64,), jnp.float32),
        'bn3_g': jnp.ones((bddim,), jnp.float32), 'bn3_b': jnp.zeros((bddim,), jnp.float32),
    }
    W1full = 0.05 * jax.random.normal(ks[3], (hidden_dim + bddim, middle_hidden), jnp.float32)
    params['fc1_wa'] = W1full[:hidden_dim]        # acts on the z1 part of the concat
    params['fc1_wb'] = W1full[hidden_dim:]        # acts on the z2 part of the concat
    params['fc1_b'] = 0.05 * jax.random.normal(ks[4], (1, middle_hidden), jnp.float32)
    params['fc2_w'] = 0.05 * jax.random.normal(ks[5], (middle_hidden, cat_num), jnp.float32)
    params['fc2_b'] = 0.05 * jax.random.normal(ks[6], (1, cat_num), jnp.float32)

    z1 = jax.random.normal(ks[7], (bs1, hidden_dim), jnp.float32)
    z2 = jax.random.normal(ks[8], (bs2, 3, H, W), jnp.float32)     # NCHW like PyTorch

    out = jax.jit(fdc_i9_forward)(params, z1, z2)
    out = jax.block_until_ready(out)

    ref = reference_forward(params, z1, z2, ker=ker)
    assert out.shape == (bs1, cat_num)
    np.testing.assert_allclose(np.asarray(out), np.asarray(ref), rtol=2e-2, atol=2e-2)
    print("KERNEL_OK")
</pallas_src>

<mosaic_0001>
module attributes {stable_mosaic.version = 11 : i64} {
  func.func @kernel(%arg0: i32, %arg1: memref<512x48xbf16, #tpu.memory_space<vmem>>, %arg2: memref<48x32xbf16, #tpu.memory_space<vmem>>, %arg3: memref<1x32xf32, #tpu.memory_space<vmem>>, %arg4: memref<1x32xf32, #tpu.memory_space<vmem>>, %arg5: memref<32x64xbf16, #tpu.memory_space<vmem>>, %arg6: memref<1x64xf32, #tpu.memory_space<vmem>>, %arg7: memref<1x64xf32, #tpu.memory_space<vmem>>, %arg8: memref<64x128xbf16, #tpu.memory_space<vmem>>, %arg9: memref<1x128xf32, #tpu.memory_space<vmem>>, %arg10: memref<1x128xf32, #tpu.memory_space<vmem>>, %arg11: memref<2x256xf32, #tpu.memory_space<vmem>>, %arg12: memref<256x128xf32, #tpu.memory_space<vmem>>, %arg13: memref<128x128xf32, #tpu.memory_space<vmem>>, %arg14: memref<1x128xf32, #tpu.memory_space<vmem>>, %arg15: memref<128x8xf32, #tpu.memory_space<vmem>>, %arg16: memref<1x8xf32, #tpu.memory_space<vmem>>, %arg17: memref<2x8xf32, #tpu.memory_space<vmem>>) attributes {dimension_semantics = [#tpu.dimension_semantics<arbitrary>], iteration_bounds = array<i64: 1>, scalar_prefetch = 0 : i64, scratch_operands = 0 : i64, tpu.core_type = #tpu.core_type<tc>, window_params = [{pipeline_mode = #tpu.pipeline_mode<synchronous>, transform_indices = @transform_0, window_bounds = array<i64: 512, 48>}, {pipeline_mode = #tpu.pipeline_mode<synchronous>, transform_indices = @transform_1, window_bounds = array<i64: 48, 32>}, {pipeline_mode = #tpu.pipeline_mode<synchronous>, transform_indices = @transform_2, window_bounds = array<i64: 1, 32>}, {pipeline_mode = #tpu.pipeline_mode<synchronous>, transform_indices = @transform_3, window_bounds = array<i64: 1, 32>}, {pipeline_mode = #tpu.pipeline_mode<synchronous>, transform_indices = @transform_4, window_bounds = array<i64: 32, 64>}, {pipeline_mode = #tpu.pipeline_mode<synchronous>, transform_indices = @transform_5, window_bounds = array<i64: 1, 64>}, {pipeline_mode = #tpu.pipeline_mode<synchronous>, transform_indices = @transform_6, window_bounds = array<i64: 1, 64>}, {pipeline_mode = #tpu.pipeline_mode<synchronous>, transform_indices = @transform_7, window_bounds = array<i64: 64, 128>}, {pipeline_mode = #tpu.pipeline_mode<synchronous>, transform_indices = @transform_8, window_bounds = array<i64: 1, 128>}, {pipeline_mode = #tpu.pipeline_mode<synchronous>, transform_indices = @transform_9, window_bounds = array<i64: 1, 128>}, {pipeline_mode = #tpu.pipeline_mode<synchronous>, transform_indices = @transform_10, window_bounds = array<i64: 2, 256>}, {pipeline_mode = #tpu.pipeline_mode<synchronous>, transform_indices = @transform_11, window_bounds = array<i64: 256, 128>}, {pipeline_mode = #tpu.pipeline_mode<synchronous>, transform_indices = @transform_12, window_bounds = array<i64: 128, 128>}, {pipeline_mode = #tpu.pipeline_mode<synchronous>, transform_indices = @transform_13, window_bounds = array<i64: 1, 128>}, {pipeline_mode = #tpu.pipeline_mode<synchronous>, transform_indices = @transform_14, window_bounds = array<i64: 128, 8>}, {pipeline_mode = #tpu.pipeline_mode<synchronous>, transform_indices = @transform_15, window_bounds = array<i64: 1, 8>}, {pipeline_mode = #tpu.pipeline_mode<synchronous>, transform_indices = @transform_16, window_bounds = array<i64: 2, 8>}]} {
    %c0 = arith.constant 0 : index
    %c0_0 = arith.constant 0 : index
    %0 = vector.load %arg1[%c0, %c0_0] : memref<512x48xbf16, #tpu.memory_space<vmem>>, vector<512x48xbf16>
    %c0_1 = arith.constant 0 : index
    %c0_2 = arith.constant 0 : index
    %1 = vector.load %arg2[%c0_1, %c0_2] : memref<48x32xbf16, #tpu.memory_space<vmem>>, vector<48x32xbf16>
    %cst = arith.constant dense<0.000000e+00> : vector<512x32xf32>
    %2 = tpu.matmul %0, %1, %cst {dimension_numbers = #tpu.dot_dimension_numbers<[1], [0], [0], [1], [0, 0, 1, 1], [], []>} : vector<512x48xbf16>, vector<48x32xbf16>, vector<512x32xf32> -> vector<512x32xf32>
    %c0_3 = arith.constant 0 : index
    %c0_4 = arith.constant 0 : index
    %3 = vector.load %arg3[%c0_3, %c0_4] : memref<1x32xf32, #tpu.memory_space<vmem>>, vector<1x32xf32>
    %c0_5 = arith.constant 0 : index
    %c0_6 = arith.constant 0 : index
    %4 = vector.load %arg4[%c0_5, %c0_6] : memref<1x32xf32, #tpu.memory_space<vmem>>, vector<1x32xf32>
    %cst_7 = arith.constant dense<0.000000e+00> : vector<32xf32>
    %5 = vector.multi_reduction <add>, %2, %cst_7 [0] : vector<512x32xf32> to vector<32xf32>
    %6 = vector.shape_cast %5 : vector<32xf32> to vector<1x32xf32>
    %cst_8 = arith.constant 5.120000e+02 : f32
    %7 = vector.broadcast %cst_8 : f32 to vector<1x32xf32>
    %8 = arith.divf %6, %7 : vector<1x32xf32>
    %9 = vector.broadcast %8 : vector<1x32xf32> to vector<512x32xf32>
    %10 = arith.subf %2, %9 : vector<512x32xf32>
    %11 = arith.mulf %10, %10 : vector<512x32xf32>
    %cst_9 = arith.constant dense<0.000000e+00> : vector<32xf32>
    %12 = vector.multi_reduction <add>, %11, %cst_9 [0] : vector<512x32xf32> to vector<32xf32>
    %13 = vector.shape_cast %12 : vector<32xf32> to vector<1x32xf32>
    %cst_10 = arith.constant 5.120000e+02 : f32
    %14 = vector.broadcast %cst_10 : f32 to vector<1x32xf32>
    %15 = arith.divf %13, %14 : vector<1x32xf32>
    %cst_11 = arith.constant 9.99999974E-6 : f32
    %16 = vector.broadcast %cst_11 : f32 to vector<1x32xf32>
    %17 = arith.addf %15, %16 : vector<1x32xf32>
    %18 = math.rsqrt %17 : vector<1x32xf32>
    %19 = vector.broadcast %18 : vector<1x32xf32> to vector<512x32xf32>
    %20 = arith.mulf %10, %19 : vector<512x32xf32>
    %21 = vector.broadcast %3 : vector<1x32xf32> to vector<512x32xf32>
    %22 = arith.mulf %20, %21 : vector<512x32xf32>
    %23 = vector.broadcast %4 : vector<1x32xf32> to vector<512x32xf32>
    %24 = arith.addf %22, %23 : vector<512x32xf32>
    %cst_12 = arith.constant 0.000000e+00 : f32
    %25 = vector.broadcast %cst_12 : f32 to vector<512x32xf32>
    %26 = arith.maximumf %24, %25 : vector<512x32xf32>
    %27 = vector.extract_strided_slice %26 {offsets = [0, 0], sizes = [128, 32], strides = [1, 1]} : vector<512x32xf32> to vector<128x32xf32>
    %28 = arith.truncf %27 : vector<128x32xf32> to vector<128x32xbf16>
    %c0_13 = arith.constant 0 : index
    %c0_14 = arith.constant 0 : index
    %29 = vector.load %arg5[%c0_13, %c0_14] : memref<32x64xbf16, #tpu.memory_space<vmem>>, vector<32x64xbf16>
    %cst_15 = arith.constant dense<0.000000e+00> : vector<128x64xf32>
    %30 = tpu.matmul %28, %29, %cst_15 {dimension_numbers = #tpu.dot_dimension_numbers<[1], [0], [0], [1], [0, 0, 1, 1], [], []>} : vector<128x32xbf16>, vector<32x64xbf16>, vector<128x64xf32> -> vector<128x64xf32>
    %c0_16 = arith.constant 0 : index
    %c0_17 = arith.constant 0 : index
    %31 = vector.load %arg6[%c0_16, %c0_17] : memref<1x64xf32, #tpu.memory_space<vmem>>, vector<1x64xf32>
    %c0_18 = arith.constant 0 : index
    %c0_19 = arith.constant 0 : index
    %32 = vector.load %arg7[%c0_18, %c0_19] : memref<1x64xf32, #tpu.memory_space<vmem>>, vector<1x64xf32>
    %cst_20 = arith.constant dense<0.000000e+00> : vector<64xf32>
    %33 = vector.multi_reduction <add>, %30, %cst_20 [0] : vector<128x64xf32> to vector<64xf32>
    %34 = vector.shape_cast %33 : vector<64xf32> to vector<1x64xf32>
    %cst_21 = arith.constant 1.280000e+02 : f32
    %35 = vector.broadcast %cst_21 : f32 to vector<1x64xf32>
    %36 = arith.divf %34, %35 : vector<1x64xf32>
    %37 = vector.broadcast %36 : vector<1x64xf32> to vector<128x64xf32>
    %38 = arith.subf %30, %37 : vector<128x64xf32>
    %39 = arith.mulf %38, %38 : vector<128x64xf32>
    %cst_22 = arith.constant dense<0.000000e+00> : vector<64xf32>
    %40 = vector.multi_reduction <add>, %39, %cst_22 [0] : vector<128x64xf32> to vector<64xf32>
    %41 = vector.shape_cast %40 : vector<64xf32> to vector<1x64xf32>
    %cst_23 = arith.constant 1.280000e+02 : f32
    %42 = vector.broadcast %cst_23 : f32 to vector<1x64xf32>
    %43 = arith.divf %41, %42 : vector<1x64xf32>
    %cst_24 = arith.constant 9.99999974E-6 : f32
    %44 = vector.broadcast %cst_24 : f32 to vector<1x64xf32>
    %45 = arith.addf %43, %44 : vector<1x64xf32>
    %46 = math.rsqrt %45 : vector<1x64xf32>
    %47 = vector.broadcast %46 : vector<1x64xf32> to vector<128x64xf32>
    %48 = arith.mulf %38, %47 : vector<128x64xf32>
    %49 = vector.broadcast %31 : vector<1x64xf32> to vector<128x64xf32>
    %50 = arith.mulf %48, %49 : vector<128x64xf32>
    %51 = vector.broadcast %32 : vector<1x64xf32> to vector<128x64xf32>
    %52 = arith.addf %50, %51 : vector<128x64xf32>
    %cst_25 = arith.constant 0.000000e+00 : f32
    %53 = vector.broadcast %cst_25 : f32 to vector<128x64xf32>
    %54 = arith.maximumf %52, %53 : vector<128x64xf32>
    %55 = vector.extract_strided_slice %54 {offsets = [0, 0], sizes = [32, 64], strides = [1, 1]} : vector<128x64xf32> to vector<32x64xf32>
    %56 = arith.truncf %55 : vector<32x64xf32> to vector<32x64xbf16>
    %c0_26 = arith.constant 0 : index
    %c0_27 = arith.constant 0 : index
    %57 = vector.load %arg8[%c0_26, %c0_27] : memref<64x128xbf16, #tpu.memory_space<vmem>>, vector<64x128xbf16>
    %cst_28 = arith.constant dense<0.000000e+00> : vector<32x128xf32>
    %58 = tpu.matmul %56, %57, %cst_28 {dimension_numbers = #tpu.dot_dimension_numbers<[1], [0], [0], [1], [0, 0, 1, 1], [], []>} : vector<32x64xbf16>, vector<64x128xbf16>, vector<32x128xf32> -> vector<32x128xf32>
    %c0_29 = arith.constant 0 : index
    %c0_30 = arith.constant 0 : index
    %59 = vector.load %arg9[%c0_29, %c0_30] : memref<1x128xf32, #tpu.memory_space<vmem>>, vector<1x128xf32>
    %c0_31 = arith.constant 0 : index
    %c0_32 = arith.constant 0 : index
    %60 = vector.load %arg10[%c0_31, %c0_32] : memref<1x128xf32, #tpu.memory_space<vmem>>, vector<1x128xf32>
    %cst_33 = arith.constant dense<0.000000e+00> : vector<128xf32>
    %61 = vector.multi_reduction <add>, %58, %cst_33 [0] : vector<32x128xf32> to vector<128xf32>
    %62 = vector.shape_cast %61 : vector<128xf32> to vector<1x128xf32>
    %cst_34 = arith.constant 3.200000e+01 : f32
    %63 = vector.broadcast %cst_34 : f32 to vector<1x128xf32>
    %64 = arith.divf %62, %63 : vector<1x128xf32>
    %65 = vector.broadcast %64 : vector<1x128xf32> to vector<32x128xf32>
    %66 = arith.subf %58, %65 : vector<32x128xf32>
    %67 = arith.mulf %66, %66 : vector<32x128xf32>
    %cst_35 = arith.constant dense<0.000000e+00> : vector<128xf32>
    %68 = vector.multi_reduction <add>, %67, %cst_35 [0] : vector<32x128xf32> to vector<128xf32>
    %69 = vector.shape_cast %68 : vector<128xf32> to vector<1x128xf32>
    %cst_36 = arith.constant 3.200000e+01 : f32
    %70 = vector.broadcast %cst_36 : f32 to vector<1x128xf32>
    %71 = arith.divf %69, %70 : vector<1x128xf32>
    %cst_37 = arith.constant 9.99999974E-6 : f32
    %72 = vector.broadcast %cst_37 : f32 to vector<1x128xf32>
    %73 = arith.addf %71, %72 : vector<1x128xf32>
    %74 = math.rsqrt %73 : vector<1x128xf32>
    %75 = vector.broadcast %74 : vector<1x128xf32> to vector<32x128xf32>
    %76 = arith.mulf %66, %75 : vector<32x128xf32>
    %77 = vector.broadcast %59 : vector<1x128xf32> to vector<32x128xf32>
    %78 = arith.mulf %76, %77 : vector<32x128xf32>
    %79 = vector.broadcast %60 : vector<1x128xf32> to vector<32x128xf32>
    %80 = arith.addf %78, %79 : vector<32x128xf32>
    %cst_38 = arith.constant 0.000000e+00 : f32
    %81 = vector.broadcast %cst_38 : f32 to vector<32x128xf32>
    %82 = arith.maximumf %80, %81 : vector<32x128xf32>
    %83 = vector.shape_cast %82 : vector<32x128xf32> to vector<2x16x128xf32>
    %cst_39 = arith.constant dense<0.000000e+00> : vector<2x128xf32>
    %84 = vector.multi_reduction <add>, %83, %cst_39 [1] : vector<2x16x128xf32> to vector<2x128xf32>
    %85 = vector.shape_cast %84 : vector<2x128xf32> to vector<2x1x128xf32>
    %cst_40 = arith.constant 1.600000e+01 : f32
    %86 = vector.broadcast %cst_40 : f32 to vector<2x1x128xf32>
    %87 = arith.divf %85, %86 : vector<2x1x128xf32>
    %88 = vector.broadcast %87 : vector<2x1x128xf32> to vector<2x16x128xf32>
    %89 = arith.subf %83, %88 : vector<2x16x128xf32>
    %90 = arith.mulf %89, %89 : vector<2x16x128xf32>
    %cst_41 = arith.constant dense<0.000000e+00> : vector<2x128xf32>
    %91 = vector.multi_reduction <add>, %90, %cst_41 [1] : vector<2x16x128xf32> to vector<2x128xf32>
    %cst_42 = arith.constant 1.600000e+01 : f32
    %92 = vector.broadcast %cst_42 : f32 to vector<2x128xf32>
    %93 = arith.divf %91, %92 : vector<2x128xf32>
    %c0_43 = arith.constant 0 : index
    %c0_44 = arith.constant 0 : index
    %94 = vector.load %arg11[%c0_43, %c0_44] : memref<2x256xf32, #tpu.memory_space<vmem>>, vector<2x256xf32>
    %c0_45 = arith.constant 0 : index
    %c0_46 = arith.constant 0 : index
    %95 = vector.load %arg12[%c0_45, %c0_46] : memref<256x128xf32, #tpu.memory_space<vmem>>, vector<256x128xf32>
    %cst_47 = arith.constant dense<0.000000e+00> : vector<2x128xf32>
    %96 = tpu.matmul %94, %95, %cst_47 {dimension_numbers = #tpu.dot_dimension_numbers<[1], [0], [0], [1], [0, 0, 1, 1], [], []>} : vector<2x256xf32>, vector<256x128xf32>, vector<2x128xf32> -> vector<2x128xf32>
    %c0_48 = arith.constant 0 : index
    %c0_49 = arith.constant 0 : index
    %97 = vector.load %arg13[%c0_48, %c0_49] : memref<128x128xf32, #tpu.memory_space<vmem>>, vector<128x128xf32>
    %cst_50 = arith.constant dense<0.000000e+00> : vector<2x128xf32>
    %98 = tpu.matmul %93, %97, %cst_50 {dimension_numbers = #tpu.dot_dimension_numbers<[1], [0], [0], [1], [0, 0, 1, 1], [], []>} : vector<2x128xf32>, vector<128x128xf32>, vector<2x128xf32> -> vector<2x128xf32>
    %c0_51 = arith.constant 0 : index
    %c0_52 = arith.constant 0 : index
    %99 = vector.load %arg14[%c0_51, %c0_52] : memref<1x128xf32, #tpu.memory_space<vmem>>, vector<1x128xf32>
    %100 = vector.broadcast %99 : vector<1x128xf32> to vector<2x128xf32>
    %101 = arith.addf %98, %100 : vector<2x128xf32>
    %102 = vector.shape_cast %96 : vector<2x128xf32> to vector<2x1x128xf32>
    %103 = vector.shape_cast %101 : vector<2x128xf32> to vector<1x2x128xf32>
    %104 = vector.broadcast %102 : vector<2x1x128xf32> to vector<2x2x128xf32>
    %105 = vector.broadcast %103 : vector<1x2x128xf32> to vector<2x2x128xf32>
    %106 = arith.addf %104, %105 : vector<2x2x128xf32>
    %cst_53 = arith.constant 0.000000e+00 : f32
    %107 = vector.broadcast %cst_53 : f32 to vector<2x2x128xf32>
    %108 = arith.maximumf %106, %107 : vector<2x2x128xf32>
    %cst_54 = arith.constant dense<0.000000e+00> : vector<2x128xf32>
    %109 = vector.multi_reduction <add>, %108, %cst_54 [1] : vector<2x2x128xf32> to vector<2x128xf32>
    %c0_55 = arith.constant 0 : index
    %c0_56 = arith.constant 0 : index
    %110 = vector.load %arg15[%c0_55, %c0_56] : memref<128x8xf32, #tpu.memory_space<vmem>>, vector<128x8xf32>
    %cst_57 = arith.constant dense<0.000000e+00> : vector<2x8xf32>
    %111 = tpu.matmul %109, %110, %cst_57 {dimension_numbers = #tpu.dot_dimension_numbers<[1], [0], [0], [1], [0, 0, 1, 1], [], []>} : vector<2x128xf32>, vector<128x8xf32>, vector<2x8xf32> -> vector<2x8xf32>
    %c0_58 = arith.constant 0 : index
    %c0_59 = arith.constant 0 : index
    %112 = vector.load %arg16[%c0_58, %c0_59] : memref<1x8xf32, #tpu.memory_space<vmem>>, vector<1x8xf32>
    %cst_60 = arith.constant 2.000000e+00 : f32
    %113 = vector.broadcast %cst_60 : f32 to vector<1x8xf32>
    %114 = arith.mulf %113, %112 : vector<1x8xf32>
    %115 = vector.broadcast %114 : vector<1x8xf32> to vector<2x8xf32>
    %116 = arith.addf %111, %115 : vector<2x8xf32>
    %c0_61 = arith.constant 0 : index
    %c0_62 = arith.constant 0 : index
    %117 = vector.load %arg17[%c0_61, %c0_62] : memref<2x8xf32, #tpu.memory_space<vmem>>, vector<2x8xf32>
    tpu.vector_store %arg17[%c0_61, %c0_62], %116 {strides = array<i32>} : memref<2x8xf32, #tpu.memory_space<vmem>>, vector<2x8xf32>,
    return
  }
  func.func @transform_0(%arg0: i32) -> (i32, i32) {
    %c0_i32 = arith.constant 0 : i32
    %c0_i32_0 = arith.constant 0 : i32
    %c0_i32_1 = arith.constant 0 : i32
    return %c0_i32, %c0_i32_0 : i32, i32
  }
  func.func @transform_1(%arg0: i32) -> (i32, i32) {
    %c0_i32 = arith.constant 0 : i32
    %c0_i32_0 = arith.constant 0 : i32
    %c0_i32_1 = arith.constant 0 : i32
    return %c0_i32, %c0_i32_0 : i32, i32
  }
  func.func @transform_2(%arg0: i32) -> (i32, i32) {
    %c0_i32 = arith.constant 0 : i32
    %c0_i32_0 = arith.constant 0 : i32
    %c0_i32_1 = arith.constant 0 : i32
    return %c0_i32, %c0_i32_0 : i32, i32
  }
  func.func @transform_3(%arg0: i32) -> (i32, i32) {
    %c0_i32 = arith.constant 0 : i32
    %c0_i32_0 = arith.constant 0 : i32
    %c0_i32_1 = arith.constant 0 : i32
    return %c0_i32, %c0_i32_0 : i32, i32
  }
  func.func @transform_4(%arg0: i32) -> (i32, i32) {
    %c0_i32 = arith.constant 0 : i32
    %c0_i32_0 = arith.constant 0 : i32
    %c0_i32_1 = arith.constant 0 : i32
    return %c0_i32, %c0_i32_0 : i32, i32
  }
  func.func @transform_5(%arg0: i32) -> (i32, i32) {
    %c0_i32 = arith.constant 0 : i32
    %c0_i32_0 = arith.constant 0 : i32
    %c0_i32_1 = arith.constant 0 : i32
    return %c0_i32, %c0_i32_0 : i32, i32
  }
  func.func @transform_6(%arg0: i32) -> (i32, i32) {
    %c0_i32 = arith.constant 0 : i32
    %c0_i32_0 = arith.constant 0 : i32
    %c0_i32_1 = arith.constant 0 : i32
    return %c0_i32, %c0_i32_0 : i32, i32
  }
  func.func @transform_7(%arg0: i32) -> (i32, i32) {
    %c0_i32 = arith.constant 0 : i32
    %c0_i32_0 = arith.constant 0 : i32
    %c0_i32_1 = arith.constant 0 : i32
    return %c0_i32, %c0_i32_0 : i32, i32
  }
  func.func @transform_8(%arg0: i32) -> (i32, i32) {
    %c0_i32 = arith.constant 0 : i32
    %c0_i32_0 = arith.constant 0 : i32
    %c0_i32_1 = arith.constant 0 : i32
    return %c0_i32, %c0_i32_0 : i32, i32
  }
  func.func @transform_9(%arg0: i32) -> (i32, i32) {
    %c0_i32 = arith.constant 0 : i32
    %c0_i32_0 = arith.constant 0 : i32
    %c0_i32_1 = arith.constant 0 : i32
    return %c0_i32, %c0_i32_0 : i32, i32
  }
  func.func @transform_10(%arg0: i32) -> (i32, i32) {
    %c0_i32 = arith.constant 0 : i32
    %c0_i32_0 = arith.constant 0 : i32
    %c0_i32_1 = arith.constant 0 : i32
    return %c0_i32, %c0_i32_0 : i32, i32
  }
  func.func @transform_11(%arg0: i32) -> (i32, i32) {
    %c0_i32 = arith.constant 0 : i32
    %c0_i32_0 = arith.constant 0 : i32
    %c0_i32_1 = arith.constant 0 : i32
    return %c0_i32, %c0_i32_0 : i32, i32
  }
  func.func @transform_12(%arg0: i32) -> (i32, i32) {
    %c0_i32 = arith.constant 0 : i32
    %c0_i32_0 = arith.constant 0 : i32
    %c0_i32_1 = arith.constant 0 : i32
    return %c0_i32, %c0_i32_0 : i32, i32
  }
  func.func @transform_13(%arg0: i32) -> (i32, i32) {
    %c0_i32 = arith.constant 0 : i32
    %c0_i32_0 = arith.constant 0 : i32
    %c0_i32_1 = arith.constant 0 : i32
    return %c0_i32, %c0_i32_0 : i32, i32
  }
  func.func @transform_14(%arg0: i32) -> (i32, i32) {
    %c0_i32 = arith.constant 0 : i32
    %c0_i32_0 = arith.constant 0 : i32
    %c0_i32_1 = arith.constant 0 : i32
    return %c0_i32, %c0_i32_0 : i32, i32
  }
  func.func @transform_15(%arg0: i32) -> (i32, i32) {
    %c0_i32 = arith.constant 0 : i32
    %c0_i32_0 = arith.constant 0 : i32
    %c0_i32_1 = arith.constant 0 : i32
    return %c0_i32, %c0_i32_0 : i32, i32
  }
  func.func @transform_16(%arg0: i32) -> (i32, i32) {
    %c0_i32 = arith.constant 0 : i32
    %c0_i32_0 = arith.constant 0 : i32
    %c0_i32_1 = arith.constant 0 : i32
    return %c0_i32, %c0_i32_0 : i32, i32
  }
}

</mosaic_0001>

<llo_original>
// kernel: fdc_i9_forward.1
$region0: #{fdc_i9_forward.1}
  #allocation0 [shape = 'u32[]', space=smem, size = 0x4, offset = 0x4, fixed_abs, tag = 'smem constant byte address 0x4 - core index']
  #allocation1 [shape = 'u32[144,128]{1,0:T(1,128)}', space=vmem, size = 0x12000, scoped, tag = 'internal scratch']
  %s0 = inlined_call_operand.vmem [shape: bf16[512,48], index: 0, kind: input, shape index: {}]
  %s1 = inlined_call_operand.vmem [shape: bf16[48,32], index: 1, kind: input, shape index: {}]
  %s2 = inlined_call_operand.vmem [shape: f32[1,32], index: 2, kind: input, shape index: {}]
  %s3 = inlined_call_operand.vmem [shape: f32[1,32], index: 3, kind: input, shape index: {}]
  %s4 = inlined_call_operand.vmem [shape: bf16[32,64], index: 4, kind: input, shape index: {}]
  %s5 = inlined_call_operand.vmem [shape: f32[1,64], index: 5, kind: input, shape index: {}]
  %s6 = inlined_call_operand.vmem [shape: f32[1,64], index: 6, kind: input, shape index: {}]
  %s7 = inlined_call_operand.vmem [shape: bf16[64,128], index: 7, kind: input, shape index: {}]
  %s8 = inlined_call_operand.vmem [shape: f32[1,128], index: 8, kind: input, shape index: {}]
  %s9 = inlined_call_operand.vmem [shape: f32[1,128], index: 9, kind: input, shape index: {}]
  %s10 = inlined_call_operand.vmem [shape: f32[2,256], index: 10, kind: input, shape index: {}]
  %s11 = inlined_call_operand.vmem [shape: f32[256,128], index: 11, kind: input, shape index: {}]
  %s12 = inlined_call_operand.vmem [shape: f32[128,128], index: 12, kind: input, shape index: {}]
  %s13 = inlined_call_operand.vmem [shape: f32[1,128], index: 13, kind: input, shape index: {}]
  %s14 = inlined_call_operand.vmem [shape: f32[128,8], index: 14, kind: input, shape index: {}]
  %s15 = inlined_call_operand.vmem [shape: f32[1,8], index: 15, kind: input, shape index: {}]
  %s16 = inlined_call_operand.hbm [shape: f32[2,8], index: 16, kind: output, shape index: {}]
  %s17 = sld [smem:[#allocation0]]
  $region74: #{fdc_i9_forward.1} parent=0
    _
  %s19 = ssub.s32 1, %s17
  %s20 = scalar_select 0, %s19, %s17
  $region1: #{fdc_i9_forward.1} parent=0
    #allocation2 [shape = 'u8[1024]{0}', space=vmem, size = 0x400, scoped, tag = 'output window, operand 0, single buffered']
    #allocation3 [shape = 's32[1]{0}', space=sflag, size = 0x4, scoped, tag = 'scoped memory for fdc_i9_forward.1']
    %21 = vsyncpa [#allocation3], 0
    // Predicated region
    $region2: #{fdc_i9_forward.1} parent=1 // pred_check
      _
    $region3: #{fdc_i9_forward.1} parent=1 // pred_check_branch
      %23 = sbr.rel (0) target = $region5
    $region4: #{fdc_i9_forward.1} parent=1 // pred_region
      _
    $region5: #{fdc_i9_forward.1} parent=1 // pred_fallthru
      _
    // Predicated region
    $region6: #{fdc_i9_forward.1} parent=1 // pred_check
      _
    $region7: #{fdc_i9_forward.1} parent=1 // pred_check_branch
      %25 = sbr.rel (0) target = $region9
    $region8: #{fdc_i9_forward.1} parent=1 // pred_region
      _
    $region9: #{fdc_i9_forward.1} parent=1 // pred_fallthru
      _
    // Predicated region
    $region10: #{fdc_i9_forward.1} parent=1 // pred_check
      _
    $region11: #{fdc_i9_forward.1} parent=1 // pred_check_branch
      %27 = sbr.rel (0) target = $region13
    $region12: #{fdc_i9_forward.1} parent=1 // pred_region
      _
    $region13: #{fdc_i9_forward.1} parent=1 // pred_fallthru
      _
    // Predicated region
    $region14: #{fdc_i9_forward.1} parent=1 // pred_check
      _
    $region15: #{fdc_i9_forward.1} parent=1 // pred_check_branch
      %29 = sbr.rel (0) target = $region17
    $region16: #{fdc_i9_forward.1} parent=1 // pred_region
      _
    $region17: #{fdc_i9_forward.1} parent=1 // pred_fallthru
      _
    // Predicated region
    $region18: #{fdc_i9_forward.1} parent=1 // pred_check
      _
    $region19: #{fdc_i9_forward.1} parent=1 // pred_check_branch
      %31 = sbr.rel (0) target = $region21
    $region20: #{fdc_i9_forward.1} parent=1 // pred_region
      _
    $region21: #{fdc_i9_forward.1} parent=1 // pred_fallthru
      _
    // Predicated region
    $region22: #{fdc_i9_forward.1} parent=1 // pred_check
      _
    $region23: #{fdc_i9_forward.1} parent=1 // pred_check_branch
      %33 = sbr.rel (0) target = $region25
    $region24: #{fdc_i9_forward.1} parent=1 // pred_region
      _
    $region25: #{fdc_i9_forward.1} parent=1 // pred_fallthru
      _
    // Predicated region
    $region26: #{fdc_i9_forward.1} parent=1 // pred_check
      _
    $region27: #{fdc_i9_forward.1} parent=1 // pred_check_branch
      %35 = sbr.rel (0) target = $region29
    $region28: #{fdc_i9_forward.1} parent=1 // pred_region
      _
    $region29: #{fdc_i9_forward.1} parent=1 // pred_fallthru
      _
    // Predicated region
    $region30: #{fdc_i9_forward.1} parent=1 // pred_check
      _
    $region31: #{fdc_i9_forward.1} parent=1 // pred_check_branch
      %37 = sbr.rel (0) target = $region33
    $region32: #{fdc_i9_forward.1} parent=1 // pred_region
      _
    $region33: #{fdc_i9_forward.1} parent=1 // pred_fallthru
      _
    // Predicated region
    $region34: #{fdc_i9_forward.1} parent=1 // pred_check
      _
    $region35: #{fdc_i9_forward.1} parent=1 // pred_check_branch
      %39 = sbr.rel (0) target = $region37
    $region36: #{fdc_i9_forward.1} parent=1 // pred_region
      _
    $region37: #{fdc_i9_forward.1} parent=1 // pred_fallthru
      _
    // Predicated region
    $region38: #{fdc_i9_forward.1} parent=1 // pred_check
      _
    $region39: #{fdc_i9_forward.1} parent=1 // pred_check_branch
      %41 = sbr.rel (0) target = $region41
    $region40: #{fdc_i9_forward.1} parent=1 // pred_region
      _
    $region41: #{fdc_i9_forward.1} parent=1 // pred_fallthru
      _
    // Predicated region
    $region42: #{fdc_i9_forward.1} parent=1 // pred_check
      _
    $region43: #{fdc_i9_forward.1} parent=1 // pred_check_branch
      %43 = sbr.rel (0) target = $region45
    $region44: #{fdc_i9_forward.1} parent=1 // pred_region
      _
    $region45: #{fdc_i9_forward.1} parent=1 // pred_fallthru
      _
    // Predicated region
    $region46: #{fdc_i9_forward.1} parent=1 // pred_check
      _
    $region47: #{fdc_i9_forward.1} parent=1 // pred_check_branch
      %45 = sbr.rel (0) target = $region49
    $region48: #{fdc_i9_forward.1} parent=1 // pred_region
      _
    $region49: #{fdc_i9_forward.1} parent=1 // pred_fallthru
      _
    // Predicated region
    $region50: #{fdc_i9_forward.1} parent=1 // pred_check
      _
    $region51: #{fdc_i9_forward.1} parent=1 // pred_check_branch
      %47 = sbr.rel (0) target = $region53
    $region52: #{fdc_i9_forward.1} parent=1 // pred_region
      _
    $region53: #{fdc_i9_forward.1} parent=1 // pred_fallthru
      _
    // Predicated region
    $region54: #{fdc_i9_forward.1} parent=1 // pred_check
      _
    $region55: #{fdc_i9_forward.1} parent=1 // pred_check_branch
      %49 = sbr.rel (0) target = $region57
    $region56: #{fdc_i9_forward.1} parent=1 // pred_region
      _
    $region57: #{fdc_i9_forward.1} parent=1 // pred_fallthru
      _
    // Predicated region
    $region58: #{fdc_i9_forward.1} parent=1 // pred_check
      _
    $region59: #{fdc_i9_forward.1} parent=1 // pred_check_branch
      %51 = sbr.rel (0) target = $region61
    $region60: #{fdc_i9_forward.1} parent=1 // pred_region
      _
    $region61: #{fdc_i9_forward.1} parent=1 // pred_fallthru
      _
    // Predicated region
    $region62: #{fdc_i9_forward.1} parent=1 // pred_check
      _
    $region63: #{fdc_i9_forward.1} parent=1 // pred_check_branch
      %53 = sbr.rel (0) target = $region65
    $region64: #{fdc_i9_forward.1} parent=1 // pred_region
      _
    $region65: #{fdc_i9_forward.1} parent=1 // pred_fallthru
      _
    %v55 = vld [vmem:[%s0] sm:$0xf]
    %v56 = vld [vmem:[%s0 + $0x4] sm:$0xf]
    %v57 = vld [vmem:[%s0 + $0x8] sm:$0xf]
    %v58 = vld [vmem:[%s0 + $0xc] sm:$0xf]
    %v59 = vld [vmem:[%s0 + $0x10] sm:$0xf]
    %v60 = vld [vmem:[%s0 + $0x14] sm:$0xf]
    %v61 = vld [vmem:[%s0 + $0x18] sm:$0xf]
    %v62 = vld [vmem:[%s0 + $0x1c] sm:$0xf]
    %v63 = vld [vmem:[%s0 + $0x20] sm:$0xf]
    %v64 = vld [vmem:[%s0 + $0x24] sm:$0xf]
    %v65 = vld [vmem:[%s0 + $0x28] sm:$0xf]
    %v66 = vld [vmem:[%s0 + $0x2c] sm:$0xf]
    %v67 = vld [vmem:[%s0 + $0x30] sm:$0xf]
    %v68 = vld [vmem:[%s0 + $0x34] sm:$0xf]
    %v69 = vld [vmem:[%s0 + $0x38] sm:$0xf]
    %v70 = vld [vmem:[%s0 + $0x3c] sm:$0xf]
    %v71 = vld [vmem:[%s0 + $0x40] sm:$0xf]
    %v72 = vld [vmem:[%s0 + $0x44] sm:$0xf]
    %v73 = vld [vmem:[%s0 + $0x48] sm:$0xf]
    %v74 = vld [vmem:[%s0 + $0x4c] sm:$0xf]
    %v75 = vld [vmem:[%s0 + $0x50] sm:$0xf]
    %v76 = vld [vmem:[%s0 + $0x54] sm:$0xf]
    %v77 = vld [vmem:[%s0 + $0x58] sm:$0xf]
    %v78 = vld [vmem:[%s0 + $0x5c] sm:$0xf]
    %v79 = vld [vmem:[%s0 + $0x60] sm:$0xf]
    %v80 = vld [vmem:[%s0 + $0x64] sm:$0xf]
    %v81 = vld [vmem:[%s0 + $0x68] sm:$0xf]
    %v82 = vld [vmem:[%s0 + $0x6c] sm:$0xf]
    %v83 = vld [vmem:[%s0 + $0x70] sm:$0xf]
    %v84 = vld [vmem:[%s0 + $0x74] sm:$0xf]
    %v85 = vld [vmem:[%s0 + $0x78] sm:$0xf]
    %v86 = vld [vmem:[%s0 + $0x7c] sm:$0xf]
    %v87 = vld [vmem:[%s0 + $0x80] sm:$0xf]
    %v88 = vld [vmem:[%s0 + $0x84] sm:$0xf]
    %v89 = vld [vmem:[%s0 + $0x88] sm:$0xf]
    %v90 = vld [vmem:[%s0 + $0x8c] sm:$0xf]
    %v91 = vld [vmem:[%s0 + $0x90] sm:$0xf]
    %v92 = vld [vmem:[%s0 + $0x94] sm:$0xf]
    %v93 = vld [vmem:[%s0 + $0x98] sm:$0xf]
    %v94 = vld [vmem:[%s0 + $0x9c] sm:$0xf]
    %v95 = vld [vmem:[%s0 + $0xa0] sm:$0xf]
    %v96 = vld [vmem:[%s0 + $0xa4] sm:$0xf]
    %v97 = vld [vmem:[%s0 + $0xa8] sm:$0xf]
    %v98 = vld [vmem:[%s0 + $0xac] sm:$0xf]
    %v99 = vld [vmem:[%s0 + $0xb0] sm:$0xf]
    %v100 = vld [vmem:[%s0 + $0xb4] sm:$0xf]
    %v101 = vld [vmem:[%s0 + $0xb8] sm:$0xf]
    %v102 = vld [vmem:[%s0 + $0xbc] sm:$0xf]
    %v103 = vld [vmem:[%s0 + $0xc0] sm:$0xf]
    %v104 = vld [vmem:[%s0 + $0xc4] sm:$0xf]
    %v105 = vld [vmem:[%s0 + $0xc8] sm:$0xf]
    %v106 = vld [vmem:[%s0 + $0xcc] sm:$0xf]
    %v107 = vld [vmem:[%s0 + $0xd0] sm:$0xf]
    %v108 = vld [vmem:[%s0 + $0xd4] sm:$0xf]
    %v109 = vld [vmem:[%s0 + $0xd8] sm:$0xf]
    %v110 = vld [vmem:[%s0 + $0xdc] sm:$0xf]
    %v111 = vld [vmem:[%s0 + $0xe0] sm:$0xf]
    %v112 = vld [vmem:[%s0 + $0xe4] sm:$0xf]
    %v113 = vld [vmem:[%s0 + $0xe8] sm:$0xf]
    %v114 = vld [vmem:[%s0 + $0xec] sm:$0xf]
    %v115 = vld [vmem:[%s0 + $0xf0] sm:$0xf]
    %v116 = vld [vmem:[%s0 + $0xf4] sm:$0xf]
    %v117 = vld [vmem:[%s0 + $0xf8] sm:$0xf]
    %v118 = vld [vmem:[%s0 + $0xfc] sm:$0xf]
    %v119 = vld [vmem:[%s1] sm:$0xf]
    %v120 = vld [vmem:[%s1 + $0x4] sm:$0xf]
    %v121 = vld [vmem:[%s1 + $0x8] sm:$0xf]
    %v122 = vld [vmem:[%s1 + $0xc] sm:$0xf]
    %v123 = vld [vmem:[%s1 + $0x10] sm:$0xf]
    %v124 = vld [vmem:[%s1 + $0x14] sm:$0xf]
    %v189 = vunpack.c.l.b16 %v55
    %v190 = vunpack.c.l.b16 %v56
    %v191 = vunpack.c.l.b16 %v57
    %v192 = vunpack.c.l.b16 %v58
    %v193 = vunpack.c.l.b16 %v59
    %v194 = vunpack.c.l.b16 %v60
    %v195 = vunpack.c.l.b16 %v61
    %v196 = vunpack.c.l.b16 %v62
    %v197 = vunpack.c.l.b16 %v63
    %v198 = vunpack.c.l.b16 %v64
    %v199 = vunpack.c.l.b16 %v65
    %v200 = vunpack.c.l.b16 %v66
    %v201 = vunpack.c.l.b16 %v67
    %v202 = vunpack.c.l.b16 %v68
    %v203 = vunpack.c.l.b16 %v69
    %v204 = vunpack.c.l.b16 %v70
    %v205 = vunpack.c.l.b16 %v71
    %v206 = vunpack.c.l.b16 %v72
    %v207 = vunpack.c.l.b16 %v73
    %v208 = vunpack.c.l.b16 %v74
    %v209 = vunpack.c.l.b16 %v75
    %v210 = vunpack.c.l.b16 %v76
    %v211 = vunpack.c.l.b16 %v77
    %v212 = vunpack.c.l.b16 %v78
    %v213 = vunpack.c.l.b16 %v79
    %v214 = vunpack.c.l.b16 %v80
    %v215 = vunpack.c.l.b16 %v81
    %v216 = vunpack.c.l.b16 %v82
    %v217 = vunpack.c.l.b16 %v83
    %v218 = vunpack.c.l.b16 %v84
    %v219 = vunpack.c.l.b16 %v85
    %v220 = vunpack.c.l.b16 %v86
    %v221 = vunpack.c.l.b16 %v87
    %v222 = vunpack.c.l.b16 %v88
    %v223 = vunpack.c.l.b16 %v89
    %v224 = vunpack.c.l.b16 %v90
    %v225 = vunpack.c.l.b16 %v91
    %v226 = vunpack.c.l.b16 %v92
    %v227 = vunpack.c.l.b16 %v93
    %v228 = vunpack.c.l.b16 %v94
    %v229 = vunpack.c.l.b16 %v95
    %v230 = vunpack.c.l.b16 %v96
    %v231 = vunpack.c.l.b16 %v97
    %v232 = vunpack.c.l.b16 %v98
    %v233 = vunpack.c.l.b16 %v99
    %v234 = vunpack.c.l.b16 %v100
    %v235 = vunpack.c.l.b16 %v101
    %v236 = vunpack.c.l.b16 %v102
    %v237 = vunpack.c.l.b16 %v103
    %v238 = vunpack.c.l.b16 %v104
    %v239 = vunpack.c.l.b16 %v105
    %v240 = vunpack.c.l.b16 %v106
    %v241 = vunpack.c.l.b16 %v107
    %v242 = vunpack.c.l.b16 %v108
    %v243 = vunpack.c.l.b16 %v109
    %v244 = vunpack.c.l.b16 %v110
    %v245 = vunpack.c.l.b16 %v111
    %v246 = vunpack.c.l.b16 %v112
    %v247 = vunpack.c.l.b16 %v113
    %v248 = vunpack.c.l.b16 %v114
    %v249 = vunpack.c.l.b16 %v115
    %v250 = vunpack.c.l.b16 %v116
    %v251 = vunpack.c.l.b16 %v117
    %v252 = vunpack.c.l.b16 %v118
    %v253 = vpack.c.b16 %v190, %v189
    %v254 = vpack.c.b16 %v192, %v191
    %v255 = vpack.c.b16 %v194, %v193
    %v256 = vpack.c.b16 %v196, %v195
    %v257 = vpack.c.b16 %v198, %v197
    %v258 = vpack.c.b16 %v200, %v199
    %v259 = vpack.c.b16 %v202, %v201
    %v260 = vpack.c.b16 %v204, %v203
    %v261 = vpack.c.b16 %v206, %v205
    %v262 = vpack.c.b16 %v208, %v207
    %v263 = vpack.c.b16 %v210, %v209
    %v264 = vpack.c.b16 %v212, %v211
    %v265 = vpack.c.b16 %v214, %v213
    %v266 = vpack.c.b16 %v216, %v215
    %v267 = vpack.c.b16 %v218, %v217
    %v268 = vpack.c.b16 %v220, %v219
    %v269 = vpack.c.b16 %v222, %v221
    %v270 = vpack.c.b16 %v224, %v223
    %v271 = vpack.c.b16 %v226, %v225
    %v272 = vpack.c.b16 %v228, %v227
    %v273 = vpack.c.b16 %v230, %v229
    %v274 = vpack.c.b16 %v232, %v231
    %v275 = vpack.c.b16 %v234, %v233
    %v276 = vpack.c.b16 %v236, %v235
    %v277 = vpack.c.b16 %v238, %v237
    %v278 = vpack.c.b16 %v240, %v239
    %v279 = vpack.c.b16 %v242, %v241
    %v280 = vpack.c.b16 %v244, %v243
    %v281 = vpack.c.b16 %v246, %v245
    %v282 = vpack.c.b16 %v248, %v247
    %v283 = vpack.c.b16 %v250, %v249
    %v284 = vpack.c.b16 %v252, %v251
    %v291 = vunpack.c.l.b16 %v119
    %v292 = vunpack.c.l.b16 %v120
    %v293 = vunpack.c.l.b16 %v121
    %v294 = vunpack.c.l.b16 %v122
    %v295 = vunpack.c.l.b16 %v123
    %v296 = vunpack.c.l.b16 %v124
    %v297 = vpack.c.b16 %v292, %v291
    %v298 = vpack.c.b16 %v294, %v293
    %v299 = vpack.c.b16 %v296, %v295
    %vm303 = vcmask 392192
    %v305 = vsel %vm303, %v253, 0
    %v308 = vsel %vm303, %v254, 0
    %v311 = vsel %vm303, %v255, 0
    %v314 = vsel %vm303, %v256, 0
    %v317 = vsel %vm303, %v257, 0
    %v320 = vsel %vm303, %v258, 0
    %v323 = vsel %vm303, %v259, 0
    %v326 = vsel %vm303, %v260, 0
    %v329 = vsel %vm303, %v261, 0
    %v332 = vsel %vm303, %v262, 0
    %v335 = vsel %vm303, %v263, 0
    %v338 = vsel %vm303, %v264, 0
    %v341 = vsel %vm303, %v265, 0
    %v344 = vsel %vm303, %v266, 0
    %v347 = vsel %vm303, %v267, 0
    %v350 = vsel %vm303, %v268, 0
    %v353 = vsel %vm303, %v269, 0
    %v356 = vsel %vm303, %v270, 0
    %v359 = vsel %vm303, %v271, 0
    %v362 = vsel %vm303, %v272, 0
    %v365 = vsel %vm303, %v273, 0
    %v368 = vsel %vm303, %v274, 0
    %v371 = vsel %vm303, %v275, 0
    %v374 = vsel %vm303, %v276, 0
    %v377 = vsel %vm303, %v277, 0
    %v380 = vsel %vm303, %v278, 0
    %v383 = vsel %vm303, %v279, 0
    %v386 = vsel %vm303, %v280, 0
    %v389 = vsel %vm303, %v281, 0
    %v392 = vsel %vm303, %v282, 0
    %v395 = vsel %vm303, %v283, 0
    %v398 = vsel %vm303, %v284, 0
    %400 = vmatprep.subr.bf16.mxu0 0
    %401 = vmatpush1.bf16.msra.mxu0 %v297
    %402 = vmatprep.subr.bf16.mxu0 0
    %403 = vmatpush1.bf16.msra.mxu0 %v298
    %404 = vmatprep.subr.bf16.mxu0 0
    %405 = vmatpush1.bf16.msra.mxu0 %v299
    %406 = vmatprep.subr.bf16.mxu0 0
    %407 = vmatpush1.bf16.msra.mxu0 0
    %408 = vmatprep.subr.bf16.mxu0 0
    %409 = vmatpush1.bf16.msra.mxu0 0
    %410 = vmatprep.subr.bf16.mxu0 0
    %411 = vmatpush1.bf16.msra.mxu0 0
    %412 = vmatprep.subr.bf16.mxu0 0
    %413 = vmatpush1.bf16.msra.mxu0 0
    %414 = vmatprep.subr.bf16.mxu0 0
    %415 = vmatpush1.bf16.msra.mxu0 0
    %416 = vmatprep.subr.bf16.mxu0 0
    %417 = vmatpush1.bf16.msra.mxu0 0
    %418 = vmatprep.subr.bf16.mxu0 0
    %419 = vmatpush1.bf16.msra.mxu0 0
    %420 = vmatprep.subr.bf16.mxu0 0
    %421 = vmatpush1.bf16.msra.mxu0 0
    %422 = vmatprep.subr.bf16.mxu0 0
    %423 = vmatpush1.bf16.msra.mxu0 0
    %424 = vmatprep.subr.bf16.mxu0 0
    %425 = vmatpush1.bf16.msra.mxu0 0
    %426 = vmatprep.subr.bf16.mxu0 0
    %427 = vmatpush1.bf16.msra.mxu0 0
    %428 = vmatprep.subr.bf16.mxu0 0
    %429 = vmatpush1.bf16.msra.mxu0 0
    %430 = vmatprep.subr.bf16.mxu0 0
    %431 = vmatpush1.bf16.msra.mxu0 0
    %432 = vmatprep.mubr.bf16.mxu0 0
    %433 = vmatmul.mubr.bf16.gmra.mrb[0].mxu0 %v305
    %v434 = vpop.f32.mrb[0].mxu0
    %v435 = vadd.f32 0.0, %v434
    %v436 = vpop.f32.mrb[0].mxu0
    %v437 = vpop.f32.mrb[0].mxu0
    %v438 = vadd.f32 0.0, %v437
    %v439 = vpop.f32.mrb[0].mxu0
    %440 = vmatprep.mubr.bf16.mxu0 0
    %441 = vmatmul.mubr.bf16.gmra.mrb[0].mxu0 %v308
    %v442 = vpop.f32.mrb[0].mxu0
    %v443 = vadd.f32 0.0, %v442
    %v444 = vpop.f32.mrb[0].mxu0
    %v445 = vpop.f32.mrb[0].mxu0
    %v446 = vadd.f32 0.0, %v445
    %v447 = vpop.f32.mrb[0].mxu0
    %448 = vmatprep.mubr.bf16.mxu0 0
    %449 = vmatmul.mubr.bf16.gmra.mrb[0].mxu0 %v311
    %v450 = vpop.f32.mrb[0].mxu0
    %v451 = vadd.f32 0.0, %v450
    %v452 = vpop.f32.mrb[0].mxu0
    %v453 = vpop.f32.mrb[0].mxu0
    %v454 = vadd.f32 0.0, %v453
    %v455 = vpop.f32.mrb[0].mxu0
    %456 = vmatprep.mubr.bf16.mxu0 0
    %457 = vmatmul.mubr.bf16.gmra.mrb[0].mxu0 %v314
    %v458 = vpop.f32.mrb[0].mxu0
    %v459 = vadd.f32 0.0, %v458
    %v460 = vpop.f32.mrb[0].mxu0
    %v461 = vpop.f32.mrb[0].mxu0
    %v462 = vadd.f32 0.0, %v461
    %v463 = vpop.f32.mrb[0].mxu0
    %464 = vmatprep.mubr.bf16.mxu0 0
    %465 = vmatmul.mubr.bf16.gmra.mrb[0].mxu0 %v317
    %v466 = vpop.f32.mrb[0].mxu0
    %v467 = vadd.f32 0.0, %v466
    %v468 = vpop.f32.mrb[0].mxu0
    %v469 = vpop.f32.mrb[0].mxu0
    %v470 = vadd.f32 0.0, %v469
    %v471 = vpop.f32.mrb[0].mxu0
    %472 = vmatprep.mubr.bf16.mxu0 0
    %473 = vmatmul.mubr.bf16.gmra.mrb[0].mxu0 %v320
    %v474 = vpop.f32.mrb[0].mxu0
    %v475 = vadd.f32 0.0, %v474
    %v476 = vpop.f32.mrb[0].mxu0
    %v477 = vpop.f32.mrb[0].mxu0
    %v478 = vadd.f32 0.0, %v477
    %v479 = vpop.f32.mrb[0].mxu0
    %480 = vmatprep.mubr.bf16.mxu0 0
    %481 = vmatmul.mubr.bf16.gmra.mrb[0].mxu0 %v323
    %v482 = vpop.f32.mrb[0].mxu0
    %v483 = vadd.f32 0.0, %v482
    %v484 = vpop.f32.mrb[0].mxu0
    %v485 = vpop.f32.mrb[0].mxu0
    %v486 = vadd.f32 0.0, %v485
    %v487 = vpop.f32.mrb[0].mxu0
    %488 = vmatprep.mubr.bf16.mxu0 0
    %489 = vmatmul.mubr.bf16.gmra.mrb[0].mxu0 %v326
    %v490 = vpop.f32.mrb[0].mxu0
    %v491 = vadd.f32 0.0, %v490
    %v492 = vpop.f32.mrb[0].mxu0
    %v493 = vpop.f32.mrb[0].mxu0
    %v494 = vadd.f32 0.0, %v493
    %v495 = vpop.f32.mrb[0].mxu0
    %496 = vmatprep.mubr.bf16.mxu0 0
    %497 = vmatmul.mubr.bf16.gmra.mrb[0].mxu0 %v329
    %v498 = vpop.f32.mrb[0].mxu0
    %v499 = vadd.f32 0.0, %v498
    %v500 = vpop.f32.mrb[0].mxu0
    %v501 = vpop.f32.mrb[0].mxu0
    %v502 = vadd.f32 0.0, %v501
    %v503 = vpop.f32.mrb[0].mxu0
    %504 = vmatprep.mubr.bf16.mxu0 0
    %505 = vmatmul.mubr.bf16.gmra.mrb[0].mxu0 %v332
    %v506 = vpop.f32.mrb[0].mxu0
    %v507 = vadd.f32 0.0, %v506
    %v508 = vpop.f32.mrb[0].mxu0
    %v509 = vpop.f32.mrb[0].mxu0
    %v510 = vadd.f32 0.0, %v509
    %v511 = vpop.f32.mrb[0].mxu0
    %512 = vmatprep.mubr.bf16.mxu0 0
    %513 = vmatmul.mubr.bf16.gmra.mrb[0].mxu0 %v335
    %v514 = vpop.f32.mrb[0].mxu0
    %v515 = vadd.f32 0.0, %v514
    %v516 = vpop.f32.mrb[0].mxu0
    %v517 = vpop.f32.mrb[0].mxu0
    %v518 = vadd.f32 0.0, %v517
    %v519 = vpop.f32.mrb[0].mxu0
    %520 = vmatprep.mubr.bf16.mxu0 0
    %521 = vmatmul.mubr.bf16.gmra.mrb[0].mxu0 %v338
    %v522 = vpop.f32.mrb[0].mxu0
    %v523 = vadd.f32 0.0, %v522
    %v524 = vpop.f32.mrb[0].mxu0
    %v525 = vpop.f32.mrb[0].mxu0
    %v526 = vadd.f32 0.0, %v525
    %v527 = vpop.f32.mrb[0].mxu0
    %528 = vmatprep.mubr.bf16.mxu0 0
    %529 = vmatmul.mubr.bf16.gmra.mrb[0].mxu0 %v341
    %v530 = vpop.f32.mrb[0].mxu0
    %v531 = vadd.f32 0.0, %v530
    %v532 = vpop.f32.mrb[0].mxu0
    %v533 = vpop.f32.mrb[0].mxu0
    %v534 = vadd.f32 0.0, %v533
    %v535 = vpop.f32.mrb[0].mxu0
    %536 = vmatprep.mubr.bf16.mxu0 0
    %537 = vmatmul.mubr.bf16.gmra.mrb[0].mxu0 %v344
    %v538 = vpop.f32.mrb[0].mxu0
    %v539 = vadd.f32 0.0, %v538
    %v540 = vpop.f32.mrb[0].mxu0
    %v541 = vpop.f32.mrb[0].mxu0
    %v542 = vadd.f32 0.0, %v541
    %v543 = vpop.f32.mrb[0].mxu0
    %544 = vmatprep.mubr.bf16.mxu0 0
    %545 = vmatmul.mubr.bf16.gmra.mrb[0].mxu0 %v347
    %v546 = vpop.f32.mrb[0].mxu0
    %v547 = vadd.f32 0.0, %v546
    %v548 = vpop.f32.mrb[0].mxu0
    %v549 = vpop.f32.mrb[0].mxu0
    %v550 = vadd.f32 0.0, %v549
    %v551 = vpop.f32.mrb[0].mxu0
    %552 = vmatprep.mubr.bf16.mxu0 0
    %553 = vmatmul.mubr.bf16.gmra.mrb[0].mxu0 %v350
    %v554 = vpop.f32.mrb[0].mxu0
    %v555 = vadd.f32 0.0, %v554
    %v556 = vpop.f32.mrb[0].mxu0
    %v557 = vpop.f32.mrb[0].mxu0
    %v558 = vadd.f32 0.0, %v557
    %v559 = vpop.f32.mrb[0].mxu0
    %560 = vmatprep.mubr.bf16.mxu0 0
    %561 = vmatmul.mubr.bf16.gmra.mrb[0].mxu0 %v353
    %v562 = vpop.f32.mrb[0].mxu0
    %v563 = vadd.f32 0.0, %v562
    %v564 = vpop.f32.mrb[0].mxu0
    %v565 = vpop.f32.mrb[0].mxu0
    %v566 = vadd.f32 0.0, %v565
    %v567 = vpop.f32.mrb[0].mxu0
    %568 = vmatprep.mubr.bf16.mxu0 0
    %569 = vmatmul.mubr.bf16.gmra.mrb[0].mxu0 %v356
    %v570 = vpop.f32.mrb[0].mxu0
    %v571 = vadd.f32 0.0, %v570
    %v572 = vpop.f32.mrb[0].mxu0
    %v573 = vpop.f32.mrb[0].mxu0
    %v574 = vadd.f32 0.0, %v573
    %v575 = vpop.f32.mrb[0].mxu0
    %576 = vmatprep.mubr.bf16.mxu0 0
    %577 = vmatmul.mubr.bf16.gmra.mrb[0].mxu0 %v359
    %v578 = vpop.f32.mrb[0].mxu0
    %v579 = vadd.f32 0.0, %v578
    %v580 = vpop.f32.mrb[0].mxu0
    %v581 = vpop.f32.mrb[0].mxu0
    %v582 = vadd.f32 0.0, %v581
    %v583 = vpop.f32.mrb[0].mxu0
    %584 = vmatprep.mubr.bf16.mxu0 0
    %585 = vmatmul.mubr.bf16.gmra.mrb[0].mxu0 %v362
    %v586 = vpop.f32.mrb[0].mxu0
    %v587 = vadd.f32 0.0, %v586
    %v588 = vpop.f32.mrb[0].mxu0
    %v589 = vpop.f32.mrb[0].mxu0
    %v590 = vadd.f32 0.0, %v589
    %v591 = vpop.f32.mrb[0].mxu0
    %592 = vmatprep.mubr.bf16.mxu0 0
    %593 = vmatmul.mubr.bf16.gmra.mrb[0].mxu0 %v365
    %v594 = vpop.f32.mrb[0].mxu0
    %v595 = vadd.f32 0.0, %v594
    %v596 = vpop.f32.mrb[0].mxu0
    %v597 = vpop.f32.mrb[0].mxu0
    %v598 = vadd.f32 0.0, %v597
    %v599 = vpop.f32.mrb[0].mxu0
    %600 = vmatprep.mubr.bf16.mxu0 0
    %601 = vmatmul.mubr.bf16.gmra.mrb[0].mxu0 %v368
    %v602 = vpop.f32.mrb[0].mxu0
    %v603 = vadd.f32 0.0, %v602
    %v604 = vpop.f32.mrb[0].mxu0
    %v605 = vpop.f32.mrb[0].mxu0
    %v606 = vadd.f32 0.0, %v605
    %v607 = vpop.f32.mrb[0].mxu0
    %608 = vmatprep.mubr.bf16.mxu0 0
    %609 = vmatmul.mubr.bf16.gmra.mrb[0].mxu0 %v371
    %v610 = vpop.f32.mrb[0].mxu0
    %v611 = vadd.f32 0.0, %v610
    %v612 = vpop.f32.mrb[0].mxu0
    %v613 = vpop.f32.mrb[0].mxu0
    %v614 = vadd.f32 0.0, %v613
    %v615 = vpop.f32.mrb[0].mxu0
    %616 = vmatprep.mubr.bf16.mxu0 0
    %617 = vmatmul.mubr.bf16.gmra.mrb[0].mxu0 %v374
    %v618 = vpop.f32.mrb[0].mxu0
    %v619 = vadd.f32 0.0, %v618
    %v620 = vpop.f32.mrb[0].mxu0
    %v621 = vpop.f32.mrb[0].mxu0
    %v622 = vadd.f32 0.0, %v621
    %v623 = vpop.f32.mrb[0].mxu0
    %624 = vmatprep.mubr.bf16.mxu0 0
    %625 = vmatmul.mubr.bf16.gmra.mrb[0].mxu0 %v377
    %v626 = vpop.f32.mrb[0].mxu0
    %v627 = vadd.f32 0.0, %v626
    %v628 = vpop.f32.mrb[0].mxu0
    %v629 = vpop.f32.mrb[0].mxu0
    %v630 = vadd.f32 0.0, %v629
    %v631 = vpop.f32.mrb[0].mxu0
    %632 = vmatprep.mubr.bf16.mxu0 0
    %633 = vmatmul.mubr.bf16.gmra.mrb[0].mxu0 %v380
    %v634 = vpop.f32.mrb[0].mxu0
    %v635 = vadd.f32 0.0, %v634
    %v636 = vpop.f32.mrb[0].mxu0
    %v637 = vpop.f32.mrb[0].mxu0
    %v638 = vadd.f32 0.0, %v637
    %v639 = vpop.f32.mrb[0].mxu0
    %640 = vmatprep.mubr.bf16.mxu0 0
    %641 = vmatmul.mubr.bf16.gmra.mrb[0].mxu0 %v383
    %v642 = vpop.f32.mrb[0].mxu0
    %v643 = vadd.f32 0.0, %v642
    %v644 = vpop.f32.mrb[0].mxu0
    %v645 = vpop.f32.mrb[0].mxu0
    %v646 = vadd.f32 0.0, %v645
    %v647 = vpop.f32.mrb[0].mxu0
    %648 = vmatprep.mubr.bf16.mxu0 0
    %649 = vmatmul.mubr.bf16.gmra.mrb[0].mxu0 %v386
    %v650 = vpop.f32.mrb[0].mxu0
    %v651 = vadd.f32 0.0, %v650
    %v652 = vpop.f32.mrb[0].mxu0
    %v653 = vpop.f32.mrb[0].mxu0
    %v654 = vadd.f32 0.0, %v653
    %v655 = vpop.f32.mrb[0].mxu0
    %656 = vmatprep.mubr.bf16.mxu0 0
    %657 = vmatmul.mubr.bf16.gmra.mrb[0].mxu0 %v389
    %v658 = vpop.f32.mrb[0].mxu0
    %v659 = vadd.f32 0.0, %v658
    %v660 = vpop.f32.mrb[0].mxu0
    %v661 = vpop.f32.mrb[0].mxu0
    %v662 = vadd.f32 0.0, %v661
    %v663 = vpop.f32.mrb[0].mxu0
    %664 = vmatprep.mubr.bf16.mxu0 0
    %665 = vmatmul.mubr.bf16.gmra.mrb[0].mxu0 %v392
    %v666 = vpop.f32.mrb[0].mxu0
    %v667 = vadd.f32 0.0, %v666
    %v668 = vpop.f32.mrb[0].mxu0
    %v669 = vpop.f32.mrb[0].mxu0
    %v670 = vadd.f32 0.0, %v669
    %v671 = vpop.f32.mrb[0].mxu0
    %672 = vmatprep.mubr.bf16.mxu0 0
    %673 = vmatmul.mubr.bf16.gmra.mrb[0].mxu0 %v395
    %v674 = vpop.f32.mrb[0].mxu0
    %v675 = vadd.f32 0.0, %v674
    %v676 = vpop.f32.mrb[0].mxu0
    %v677 = vpop.f32.mrb[0].mxu0
    %v678 = vadd.f32 0.0, %v677
    %v679 = vpop.f32.mrb[0].mxu0
    %680 = vmatprep.mubr.bf16.mxu0 0
    %681 = vmatmul.mubr.bf16.gmra.mrb[0].mxu0 %v398
    %v682 = vpop.f32.mrb[0].mxu0
    %v683 = vadd.f32 0.0, %v682
    %v684 = vpop.f32.mrb[0].mxu0
    %v685 = vpop.f32.mrb[0].mxu0
    %v686 = vadd.f32 0.0, %v685
    %v687 = vpop.f32.mrb[0].mxu0
    %688 = vdwg.mxu0
    %v689 = vld [vmem:[%s2] sm:$0x1]
    %v690 = vld [vmem:[%s3] sm:$0x1]
    %vm691 = vcmask 261120
    %v692 = vsel %vm691, %v435, 0.0
    %v693 = vsel %vm691, %v438, 0.0
    %v694 = vadd.f32 %v692, %v693
    %v695 = vsel %vm691, %v443, 0.0
    %v696 = vadd.f32 %v694, %v695
    %v697 = vsel %vm691, %v446, 0.0
    %v698 = vadd.f32 %v696, %v697
    %v699 = vsel %vm691, %v451, 0.0
    %v700 = vadd.f32 %v698, %v699
    %v701 = vsel %vm691, %v454, 0.0
    %v702 = vadd.f32 %v700, %v701
    %v703 = vsel %vm691, %v459, 0.0
    %v704 = vadd.f32 %v702, %v703
    %v705 = vsel %vm691, %v462, 0.0
    %v706 = vadd.f32 %v704, %v705
    %v707 = vsel %vm691, %v467, 0.0
    %v708 = vadd.f32 %v706, %v707
    %v709 = vsel %vm691, %v470, 0.0
    %v710 = vadd.f32 %v708, %v709
    %v711 = vsel %vm691, %v475, 0.0
    %v712 = vadd.f32 %v710, %v711
    %v713 = vsel %vm691, %v478, 0.0
    %v714 = vadd.f32 %v712, %v713
    %v715 = vsel %vm691, %v483, 0.0
    %v716 = vadd.f32 %v714, %v715
    %v717 = vsel %vm691, %v486, 0.0
    %v718 = vadd.f32 %v716, %v717
    %v719 = vsel %vm691, %v491, 0.0
    %v720 = vadd.f32 %v718, %v719
    %v721 = vsel %vm691, %v494, 0.0
    %v722 = vadd.f32 %v720, %v721
    %v723 = vsel %vm691, %v499, 0.0
    %v724 = vadd.f32 %v722, %v723
    %v725 = vsel %vm691, %v502, 0.0
    %v726 = vadd.f32 %v724, %v725
    %v727 = vsel %vm691, %v507, 0.0
    %v728 = vadd.f32 %v726, %v727
    %v729 = vsel %vm691, %v510, 0.0
    %v730 = vadd.f32 %v728, %v729
    %v731 = vsel %vm691, %v515, 0.0
    %v732 = vadd.f32 %v730, %v731
    %v733 = vsel %vm691, %v518, 0.0
    %v734 = vadd.f32 %v732, %v733
    %v735 = vsel %vm691, %v523, 0.0
    %v736 = vadd.f32 %v734, %v735
    %v737 = vsel %vm691, %v526, 0.0
    %v738 = vadd.f32 %v736, %v737
    %v739 = vsel %vm691, %v531, 0.0
    %v740 = vadd.f32 %v738, %v739
    %v741 = vsel %vm691, %v534, 0.0
    %v742 = vadd.f32 %v740, %v741
    %v743 = vsel %vm691, %v539, 0.0
    %v744 = vadd.f32 %v742, %v743
    %v745 = vsel %vm691, %v542, 0.0
    %v746 = vadd.f32 %v744, %v745
    %v747 = vsel %vm691, %v547, 0.0
    %v748 = vadd.f32 %v746, %v747
    %v749 = vsel %vm691, %v550, 0.0
    %v750 = vadd.f32 %v748, %v749
    %v751 = vsel %vm691, %v555, 0.0
    %v752 = vadd.f32 %v750, %v751
    %v753 = vsel %vm691, %v558, 0.0
    %v754 = vadd.f32 %v752, %v753
    %v755 = vsel %vm691, %v563, 0.0
    %v756 = vadd.f32 %v754, %v755
    %v757 = vsel %vm691, %v566, 0.0
    %v758 = vadd.f32 %v756, %v757
    %v759 = vsel %vm691, %v571, 0.0
    %v760 = vadd.f32 %v758, %v759
    %v761 = vsel %vm691, %v574, 0.0
    %v762 = vadd.f32 %v760, %v761
    %v763 = vsel %vm691, %v579, 0.0
    %v764 = vadd.f32 %v762, %v763
    %v765 = vsel %vm691, %v582, 0.0
    %v766 = vadd.f32 %v764, %v765
    %v767 = vsel %vm691, %v587, 0.0
    %v768 = vadd.f32 %v766, %v767
    %v769 = vsel %vm691, %v590, 0.0
    %v770 = vadd.f32 %v768, %v769
    %v771 = vsel %vm691, %v595, 0.0
    %v772 = vadd.f32 %v770, %v771
    %v773 = vsel %vm691, %v598, 0.0
    %v774 = vadd.f32 %v772, %v773
    %v775 = vsel %vm691, %v603, 0.0
    %v776 = vadd.f32 %v774, %v775
    %v777 = vsel %vm691, %v606, 0.0
    %v778 = vadd.f32 %v776, %v777
    %v779 = vsel %vm691, %v611, 0.0
    %v780 = vadd.f32 %v778, %v779
    %v781 = vsel %vm691, %v614, 0.0
    %v782 = vadd.f32 %v780, %v781
    %v783 = vsel %vm691, %v619, 0.0
    %v784 = vadd.f32 %v782, %v783
    %v785 = vsel %vm691, %v622, 0.0
    %v786 = vadd.f32 %v784, %v785
    %v787 = vsel %vm691, %v627, 0.0
    %v788 = vadd.f32 %v786, %v787
    %v789 = vsel %vm691, %v630, 0.0
    %v790 = vadd.f32 %v788, %v789
    %v791 = vsel %vm691, %v635, 0.0
    %v792 = vadd.f32 %v790, %v791
    %v793 = vsel %vm691, %v638, 0.0
    %v794 = vadd.f32 %v792, %v793
    %v795 = vsel %vm691, %v643, 0.0
    %v796 = vadd.f32 %v794, %v795
    %v797 = vsel %vm691, %v646, 0.0
    %v798 = vadd.f32 %v796, %v797
    %v799 = vsel %vm691, %v651, 0.0
    %v800 = vadd.f32 %v798, %v799
    %v801 = vsel %vm691, %v654, 0.0
    %v802 = vadd.f32 %v800, %v801
    %v803 = vsel %vm691, %v659, 0.0
    %v804 = vadd.f32 %v802, %v803
    %v805 = vsel %vm691, %v662, 0.0
    %v806 = vadd.f32 %v804, %v805
    %v807 = vsel %vm691, %v667, 0.0
    %v808 = vadd.f32 %v806, %v807
    %v809 = vsel %vm691, %v670, 0.0
    %v810 = vadd.f32 %v808, %v809
    %v811 = vsel %vm691, %v675, 0.0
    %v812 = vadd.f32 %v810, %v811
    %v813 = vsel %vm691, %v678, 0.0
    %v814 = vadd.f32 %v812, %v813
    %v815 = vsel %vm691, %v683, 0.0
    %v816 = vadd.f32 %v814, %v815
    %v817 = vsel %vm691, %v686, 0.0
    %v818 = vadd.f32 %v816, %v817
    %v819 = vrot.slane %v818, 4
    %v820 = vadd.f32 %v818, %v819
    %v821 = vrot.slane %v820, 2
    %v822 = vadd.f32 %v820, %v821
    %v823 = vrot.slane %v822, 1
    %v824 = vadd.f32 %v822, %v823
    %v825 = vrcp.pop 512.0
    %v826 = vmul.f32 %v824, %v825
    %v827 = vsub.f32 %v435, %v826
    %v828 = vsub.f32 %v438, %v826
    %v829 = vsub.f32 %v443, %v826
    %v830 = vsub.f32 %v446, %v826
    %v831 = vsub.f32 %v451, %v826
    %v832 = vsub.f32 %v454, %v826
    %v833 = vsub.f32 %v459, %v826
    %v834 = vsub.f32 %v462, %v826
    %v835 = vsub.f32 %v467, %v826
    %v836 = vsub.f32 %v470, %v826
    %v837 = vsub.f32 %v475, %v826
    %v838 = vsub.f32 %v478, %v826
    %v839 = vsub.f32 %v483, %v826
    %v840 = vsub.f32 %v486, %v826
    %v841 = vsub.f32 %v491, %v826
    %v842 = vsub.f32 %v494, %v826
    %v843 = vsub.f32 %v499, %v826
    %v844 = vsub.f32 %v502, %v826
    %v845 = vsub.f32 %v507, %v826
    %v846 = vsub.f32 %v510, %v826
    %v847 = vsub.f32 %v515, %v826
    %v848 = vsub.f32 %v518, %v826
    %v849 = vsub.f32 %v523, %v826
    %v850 = vsub.f32 %v526, %v826
    %v851 = vsub.f32 %v531, %v826
    %v852 = vsub.f32 %v534, %v826
    %v853 = vsub.f32 %v539, %v826
    %v854 = vsub.f32 %v542, %v826
    %v855 = vsub.f32 %v547, %v826
    %v856 = vsub.f32 %v550, %v826
    %v857 = vsub.f32 %v555, %v826
    %v858 = vsub.f32 %v558, %v826
    %v859 = vsub.f32 %v563, %v826
    %v860 = vsub.f32 %v566, %v826
    %v861 = vsub.f32 %v571, %v826
    %v862 = vsub.f32 %v574, %v826
    %v863 = vsub.f32 %v579, %v826
    %v864 = vsub.f32 %v582, %v826
    %v865 = vsub.f32 %v587, %v826
    %v866 = vsub.f32 %v590, %v826
    %v867 = vsub.f32 %v595, %v826
    %v868 = vsub.f32 %v598, %v826
    %v869 = vsub.f32 %v603, %v826
    %v870 = vsub.f32 %v606, %v826
    %v871 = vsub.f32 %v611, %v826
    %v872 = vsub.f32 %v614, %v826
    %v873 = vsub.f32 %v619, %v826
    %v874 = vsub.f32 %v622, %v826
    %v875 = vsub.f32 %v627, %v826
    %v876 = vsub.f32 %v630, %v826
    %v877 = vsub.f32 %v635, %v826
    %v878 = vsub.f32 %v638, %v826
    %v879 = vsub.f32 %v643, %v826
    %v880 = vsub.f32 %v646, %v826
    %v881 = vsub.f32 %v651, %v826
    %v882 = vsub.f32 %v654, %v826
    %v883 = vsub.f32 %v659, %v826
    %v884 = vsub.f32 %v662, %v826
    %v885 = vsub.f32 %v667, %v826
    %v886 = vsub.f32 %v670, %v826
    %v887 = vsub.f32 %v675, %v826
    %v888 = vsub.f32 %v678, %v826
    %v889 = vsub.f32 %v683, %v826
    %v890 = vsub.f32 %v686, %v826
    %v891 = vmul.f32 %v827, %v827
    %v892 = vmul.f32 %v828, %v828
    %v893 = vmul.f32 %v829, %v829
    %v894 = vmul.f32 %v830, %v830
    %v895 = vmul.f32 %v831, %v831
    %v896 = vmul.f32 %v832, %v832
    %v897 = vmul.f32 %v833, %v833
    %v898 = vmul.f32 %v834, %v834
    %v899 = vmul.f32 %v835, %v835
    %v900 = vmul.f32 %v836, %v836
    %v901 = vmul.f32 %v837, %v837
    %v902 = vmul.f32 %v838, %v838
    %v903 = vmul.f32 %v839, %v839
    %v904 = vmul.f32 %v840, %v840
    %v905 = vmul.f32 %v841, %v841
    %v906 = vmul.f32 %v842, %v842
    %v907 = vmul.f32 %v843, %v843
    %v908 = vmul.f32 %v844, %v844
    %v909 = vmul.f32 %v845, %v845
    %v910 = vmul.f32 %v846, %v846
    %v911 = vmul.f32 %v847, %v847
    %v912 = vmul.f32 %v848, %v848
    %v913 = vmul.f32 %v849, %v849
    %v914 = vmul.f32 %v850, %v850
    %v915 = vmul.f32 %v851, %v851
    %v916 = vmul.f32 %v852, %v852
    %v917 = vmul.f32 %v853, %v853
    %v918 = vmul.f32 %v854, %v854
    %v919 = vmul.f32 %v855, %v855
    %v920 = vmul.f32 %v856, %v856
    %v921 = vmul.f32 %v857, %v857
    %v922 = vmul.f32 %v858, %v858
    %v923 = vmul.f32 %v859, %v859
    %v924 = vmul.f32 %v860, %v860
    %v925 = vmul.f32 %v861, %v861
    %v926 = vmul.f32 %v862, %v862
    %v927 = vmul.f32 %v863, %v863
    %v928 = vmul.f32 %v864, %v864
    %v929 = vmul.f32 %v865, %v865
    %v930 = vmul.f32 %v866, %v866
    %v931 = vmul.f32 %v867, %v867
    %v932 = vmul.f32 %v868, %v868
    %v933 = vmul.f32 %v869, %v869
    %v934 = vmul.f32 %v870, %v870
    %v935 = vmul.f32 %v871, %v871
    %v936 = vmul.f32 %v872, %v872
    %v937 = vmul.f32 %v873, %v873
    %v938 = vmul.f32 %v874, %v874
    %v939 = vmul.f32 %v875, %v875
    %v940 = vmul.f32 %v876, %v876
    %v941 = vmul.f32 %v877, %v877
    %v942 = vmul.f32 %v878, %v878
    %v943 = vmul.f32 %v879, %v879
    %v944 = vmul.f32 %v880, %v880
    %v945 = vmul.f32 %v881, %v881
    %v946 = vmul.f32 %v882, %v882
    %v947 = vmul.f32 %v883, %v883
    %v948 = vmul.f32 %v884, %v884
    %v949 = vmul.f32 %v885, %v885
    %v950 = vmul.f32 %v886, %v886
    %v951 = vmul.f32 %v887, %v887
    %v952 = vmul.f32 %v888, %v888
    %v953 = vmul.f32 %v889, %v889
    %v954 = vmul.f32 %v890, %v890
    %v955 = vsel %vm691, %v891, 0.0
    %v956 = vsel %vm691, %v892, 0.0
    %v957 = vadd.f32 %v955, %v956
    %v958 = vsel %vm691, %v893, 0.0
    %v959 = vadd.f32 %v957, %v958
    %v960 = vsel %vm691, %v894, 0.0
    %v961 = vadd.f32 %v959, %v960
    %v962 = vsel %vm691, %v895, 0.0
    %v963 = vadd.f32 %v961, %v962
    %v964 = vsel %vm691, %v896, 0.0
    %v965 = vadd.f32 %v963, %v964
    %v966 = vsel %vm691, %v897, 0.0
    %v967 = vadd.f32 %v965, %v966
    %v968 = vsel %vm691, %v898, 0.0
    %v969 = vadd.f32 %v967, %v968
    %v970 = vsel %vm691, %v899, 0.0
    %v971 = vadd.f32 %v969, %v970
    %v972 = vsel %vm691, %v900, 0.0
    %v973 = vadd.f32 %v971, %v972
    %v974 = vsel %vm691, %v901, 0.0
    %v975 = vadd.f32 %v973, %v974
    %v976 = vsel %vm691, %v902, 0.0
    %v977 = vadd.f32 %v975, %v976
    %v978 = vsel %vm691, %v903, 0.0
    %v979 = vadd.f32 %v977, %v978
    %v980 = vsel %vm691, %v904, 0.0
    %v981 = vadd.f32 %v979, %v980
    %v982 = vsel %vm691, %v905, 0.0
    %v983 = vadd.f32 %v981, %v982
    %v984 = vsel %vm691, %v906, 0.0
    %v985 = vadd.f32 %v983, %v984
    %v986 = vsel %vm691, %v907, 0.0
    %v987 = vadd.f32 %v985, %v986
    %v988 = vsel %vm691, %v908, 0.0
    %v989 = vadd.f32 %v987, %v988
    %v990 = vsel %vm691, %v909, 0.0
    %v991 = vadd.f32 %v989, %v990
    %v992 = vsel %vm691, %v910, 0.0
    %v993 = vadd.f32 %v991, %v992
    %v994 = vsel %vm691, %v911, 0.0
    %v995 = vadd.f32 %v993, %v994
    %v996 = vsel %vm691, %v912, 0.0
    %v997 = vadd.f32 %v995, %v996
    %v998 = vsel %vm691, %v913, 0.0
    %v999 = vadd.f32 %v997, %v998
    %v1000 = vsel %vm691, %v914, 0.0
    %v1001 = vadd.f32 %v999, %v1000
    %v1002 = vsel %vm691, %v915, 0.0
    %v1003 = vadd.f32 %v1001, %v1002
    %v1004 = vsel %vm691, %v916, 0.0
    %v1005 = vadd.f32 %v1003, %v1004
    %v1006 = vsel %vm691, %v917, 0.0
    %v1007 = vadd.f32 %v1005, %v1006
    %v1008 = vsel %vm691, %v918, 0.0
    %v1009 = vadd.f32 %v1007, %v1008
    %v1010 = vsel %vm691, %v919, 0.0
    %v1011 = vadd.f32 %v1009, %v1010
    %v1012 = vsel %vm691, %v920, 0.0
    %v1013 = vadd.f32 %v1011, %v1012
    %v1014 = vsel %vm691, %v921, 0.0
    %v1015 = vadd.f32 %v1013, %v1014
    %v1016 = vsel %vm691, %v922, 0.0
    %v1017 = vadd.f32 %v1015, %v1016
    %v1018 = vsel %vm691, %v923, 0.0
    %v1019 = vadd.f32 %v1017, %v1018
    %v1020 = vsel %vm691, %v924, 0.0
    %v1021 = vadd.f32 %v1019, %v1020
    %v1022 = vsel %vm691, %v925, 0.0
    %v1023 = vadd.f32 %v1021, %v1022
    %v1024 = vsel %vm691, %v926, 0.0
    %v1025 = vadd.f32 %v1023, %v1024
    %v1026 = vsel %vm691, %v927, 0.0
    %v1027 = vadd.f32 %v1025, %v1026
    %v1028 = vsel %vm691, %v928, 0.0
    %v1029 = vadd.f32 %v1027, %v1028
    %v1030 = vsel %vm691, %v929, 0.0
    %v1031 = vadd.f32 %v1029, %v1030
    %v1032 = vsel %vm691, %v930, 0.0
    %v1033 = vadd.f32 %v1031, %v1032
    %v1034 = vsel %vm691, %v931, 0.0
    %v1035 = vadd.f32 %v1033, %v1034
    %v1036 = vsel %vm691, %v932, 0.0
    %v1037 = vadd.f32 %v1035, %v1036
    %v1038 = vsel %vm691, %v933, 0.0
    %v1039 = vadd.f32 %v1037, %v1038
    %v1040 = vsel %vm691, %v934, 0.0
    %v1041 = vadd.f32 %v1039, %v1040
    %v1042 = vsel %vm691, %v935, 0.0
    %v1043 = vadd.f32 %v1041, %v1042
    %v1044 = vsel %vm691, %v936, 0.0
    %v1045 = vadd.f32 %v1043, %v1044
    %v1046 = vsel %vm691, %v937, 0.0
    %v1047 = vadd.f32 %v1045, %v1046
    %v1048 = vsel %vm691, %v938, 0.0
    %v1049 = vadd.f32 %v1047, %v1048
    %v1050 = vsel %vm691, %v939, 0.0
    %v1051 = vadd.f32 %v1049, %v1050
    %v1052 = vsel %vm691, %v940, 0.0
    %v1053 = vadd.f32 %v1051, %v1052
    %v1054 = vsel %vm691, %v941, 0.0
    %v1055 = vadd.f32 %v1053, %v1054
    %v1056 = vsel %vm691, %v942, 0.0
    %v1057 = vadd.f32 %v1055, %v1056
    %v1058 = vsel %vm691, %v943, 0.0
    %v1059 = vadd.f32 %v1057, %v1058
    %v1060 = vsel %vm691, %v944, 0.0
    %v1061 = vadd.f32 %v1059, %v1060
    %v1062 = vsel %vm691, %v945, 0.0
    %v1063 = vadd.f32 %v1061, %v1062
    %v1064 = vsel %vm691, %v946, 0.0
    %v1065 = vadd.f32 %v1063, %v1064
    %v1066 = vsel %vm691, %v947, 0.0
    %v1067 = vadd.f32 %v1065, %v1066
    %v1068 = vsel %vm691, %v948, 0.0
    %v1069 = vadd.f32 %v1067, %v1068
    %v1070 = vsel %vm691, %v949, 0.0
    %v1071 = vadd.f32 %v1069, %v1070
    %v1072 = vsel %vm691, %v950, 0.0
    %v1073 = vadd.f32 %v1071, %v1072
    %v1074 = vsel %vm691, %v951, 0.0
    %v1075 = vadd.f32 %v1073, %v1074
    %v1076 = vsel %vm691, %v952, 0.0
    %v1077 = vadd.f32 %v1075, %v1076
    %v1078 = vsel %vm691, %v953, 0.0
    %v1079 = vadd.f32 %v1077, %v1078
    %v1080 = vsel %vm691, %v954, 0.0
    %v1081 = vadd.f32 %v1079, %v1080
    %v1082 = vrot.slane %v1081, 4
    %v1083 = vadd.f32 %v1081, %v1082
    %v1084 = vrot.slane %v1083, 2
    %v1085 = vadd.f32 %v1083, %v1084
    %v1086 = vrot.slane %v1085, 1
    %v1087 = vadd.f32 %v1085, %v1086
    %v1088 = vmul.f32 %v1087, %v825
    %v1089 = vadd.f32 %v1088, 1e-05
    %v1090 = vrsqrt.pop %v1089
    %v1091 = vmul.f32 %v827, %v1090
    %v1092 = vmul.f32 %v828, %v1090
    %v1093 = vmul.f32 %v829, %v1090
    %v1094 = vmul.f32 %v830, %v1090
    %v1095 = vmul.f32 %v831, %v1090
    %v1096 = vmul.f32 %v832, %v1090
    %v1097 = vmul.f32 %v833, %v1090
    %v1098 = vmul.f32 %v834, %v1090
    %v1099 = vmul.f32 %v835, %v1090
    %v1100 = vmul.f32 %v836, %v1090
    %v1101 = vmul.f32 %v837, %v1090
    %v1102 = vmul.f32 %v838, %v1090
    %v1103 = vmul.f32 %v839, %v1090
    %v1104 = vmul.f32 %v840, %v1090
    %v1105 = vmul.f32 %v841, %v1090
    %v1106 = vmul.f32 %v842, %v1090
    %v1108 = vlaneseq
    %v1109 = vshrl.u32 %v1108, 7
    %v1110 = vsub.s32 0, %v1109
    %v1111 = vrot.slane %v689, %v1110
    %v1113 = vmul.f32 %v1091, %v1111
    %v1114 = vmul.f32 %v1092, %v1111
    %v1115 = vmul.f32 %v1093, %v1111
    %v1116 = vmul.f32 %v1094, %v1111
    %v1117 = vmul.f32 %v1095, %v1111
    %v1118 = vmul.f32 %v1096, %v1111
    %v1119 = vmul.f32 %v1097, %v1111
    %v1120 = vmul.f32 %v1098, %v1111
    %v1121 = vmul.f32 %v1099, %v1111
    %v1122 = vmul.f32 %v1100, %v1111
    %v1123 = vmul.f32 %v1101, %v1111
    %v1124 = vmul.f32 %v1102, %v1111
    %v1125 = vmul.f32 %v1103, %v1111
    %v1126 = vmul.f32 %v1104, %v1111
    %v1127 = vmul.f32 %v1105, %v1111
    %v1128 = vmul.f32 %v1106, %v1111
    %v1130 = vlaneseq
    %v1131 = vshrl.u32 %v1130, 7
    %v1132 = vsub.s32 0, %v1131
    %v1133 = vrot.slane %v690, %v1132
    %v1135 = vadd.f32 %v1113, %v1133
    %v1136 = vadd.f32 %v1114, %v1133
    %v1137 = vadd.f32 %v1115, %v1133
    %v1138 = vadd.f32 %v1116, %v1133
    %v1139 = vadd.f32 %v1117, %v1133
    %v1140 = vadd.f32 %v1118, %v1133
    %v1141 = vadd.f32 %v1119, %v1133
    %v1142 = vadd.f32 %v1120, %v1133
    %v1143 = vadd.f32 %v1121, %v1133
    %v1144 = vadd.f32 %v1122, %v1133
    %v1145 = vadd.f32 %v1123, %v1133
    %v1146 = vadd.f32 %v1124, %v1133
    %v1147 = vadd.f32 %v1125, %v1133
    %v1148 = vadd.f32 %v1126, %v1133
    %v1149 = vadd.f32 %v1127, %v1133
    %v1150 = vadd.f32 %v1128, %v1133
    %v1151 = vmax.f32 %v1135, 0.0
    %v1152 = vmax.f32 %v1136, 0.0
    %v1153 = vmax.f32 %v1137, 0.0
    %v1154 = vmax.f32 %v1138, 0.0
    %v1155 = vmax.f32 %v1139, 0.0
    %v1156 = vmax.f32 %v1140, 0.0
    %v1157 = vmax.f32 %v1141, 0.0
    %v1158 = vmax.f32 %v1142, 0.0
    %v1159 = vmax.f32 %v1143, 0.0
    %v1160 = vmax.f32 %v1144, 0.0
    %v1161 = vmax.f32 %v1145, 0.0
    %v1162 = vmax.f32 %v1146, 0.0
    %v1163 = vmax.f32 %v1147, 0.0
    %v1164 = vmax.f32 %v1148, 0.0
    %v1165 = vmax.f32 %v1149, 0.0
    %v1166 = vmax.f32 %v1150, 0.0
    %v1167 = vpack.c.bf16 %v1152, %v1151
    %v1168 = vpack.c.bf16 %v1154, %v1153
    %v1169 = vpack.c.bf16 %v1156, %v1155
    %v1170 = vpack.c.bf16 %v1158, %v1157
    %v1171 = vpack.c.bf16 %v1160, %v1159
    %v1172 = vpack.c.bf16 %v1162, %v1161
    %v1173 = vpack.c.bf16 %v1164, %v1163
    %v1174 = vpack.c.bf16 %v1166, %v1165
    %v1175 = vld [vmem:[%s4] sm:$0xf]
    %v1176 = vld [vmem:[%s4 + $0x4] sm:$0xf]
    %v1177 = vld [vmem:[%s4 + $0x8] sm:$0xf]
    %v1178 = vld [vmem:[%s4 + $0xc] sm:$0xf]
    %v1183 = vunpack.c.l.b16 %v1175
    %v1184 = vunpack.c.l.b16 %v1176
    %v1185 = vunpack.c.l.b16 %v1177
    %v1186 = vunpack.c.l.b16 %v1178
    %v1187 = vpack.c.b16 %v1184, %v1183
    %v1188 = vpack.c.b16 %v1186, %v1185
    %v1192 = vsel %vm691, %v1167, 0
    %v1195 = vsel %vm691, %v1168, 0
    %v1198 = vsel %vm691, %v1169, 0
    %v1201 = vsel %vm691, %v1170, 0
    %v1204 = vsel %vm691, %v1171, 0
    %v1207 = vsel %vm691, %v1172, 0
    %v1210 = vsel %vm691, %v1173, 0
    %v1213 = vsel %vm691, %v1174, 0
    %1215 = vmatprep.subr.bf16.mxu0 0
    %1216 = vmatpush1.bf16.msra.mxu0 %v1187
    %1217 = vmatprep.subr.bf16.mxu0 0
    %1218 = vmatpush1.bf16.msra.mxu0 %v1188
    %1219 = vmatprep.subr.bf16.mxu0 0
    %1220 = vmatpush1.bf16.msra.mxu0 0
    %1221 = vmatprep.subr.bf16.mxu0 0
    %1222 = vmatpush1.bf16.msra.mxu0 0
    %1223 = vmatprep.subr.bf16.mxu0 0
    %1224 = vmatpush1.bf16.msra.mxu0 0
    %1225 = vmatprep.subr.bf16.mxu0 0
    %1226 = vmatpush1.bf16.msra.mxu0 0
    %1227 = vmatprep.subr.bf16.mxu0 0
    %1228 = vmatpush1.bf16.msra.mxu0 0
    %1229 = vmatprep.subr.bf16.mxu0 0
    %1230 = vmatpush1.bf16.msra.mxu0 0
    %1231 = vmatprep.subr.bf16.mxu0 0
    %1232 = vmatpush1.bf16.msra.mxu0 0
    %1233 = vmatprep.subr.bf16.mxu0 0
    %1234 = vmatpush1.bf16.msra.mxu0 0
    %1235 = vmatprep.subr.bf16.mxu0 0
    %1236 = vmatpush1.bf16.msra.mxu0 0
    %1237 = vmatprep.subr.bf16.mxu0 0
    %1238 = vmatpush1.bf16.msra.mxu0 0
    %1239 = vmatprep.subr.bf16.mxu0 0
    %1240 = vmatpush1.bf16.msra.mxu0 0
    %1241 = vmatprep.subr.bf16.mxu0 0
    %1242 = vmatpush1.bf16.msra.mxu0 0
    %1243 = vmatprep.subr.bf16.mxu0 0
    %1244 = vmatpush1.bf16.msra.mxu0 0
    %1245 = vmatprep.subr.bf16.mxu0 0
    %1246 = vmatpush1.bf16.msra.mxu0 0
    %1247 = vmatprep.mubr.bf16.mxu0 0
    %1248 = vmatmul.mubr.bf16.gmra.mrb[0].mxu0 %v1192
    %v1249 = vpop.f32.mrb[0].mxu0
    %v1250 = vadd.f32 0.0, %v1249
    %v1251 = vpop.f32.mrb[0].mxu0
    %v1252 = vpop.f32.mrb[0].mxu0
    %v1253 = vadd.f32 0.0, %v1252
    %v1254 = vpop.f32.mrb[0].mxu0
    %1255 = vmatprep.mubr.bf16.mxu0 0
    %1256 = vmatmul.mubr.bf16.gmra.mrb[0].mxu0 %v1195
    %v1257 = vpop.f32.mrb[0].mxu0
    %v1258 = vadd.f32 0.0, %v1257
    %v1259 = vpop.f32.mrb[0].mxu0
    %v1260 = vpop.f32.mrb[0].mxu0
    %v1261 = vadd.f32 0.0, %v1260
    %v1262 = vpop.f32.mrb[0].mxu0
    %1263 = vmatprep.mubr.bf16.mxu0 0
    %1264 = vmatmul.mubr.bf16.gmra.mrb[0].mxu0 %v1198
    %v1265 = vpop.f32.mrb[0].mxu0
    %v1266 = vadd.f32 0.0, %v1265
    %v1267 = vpop.f32.mrb[0].mxu0
    %v1268 = vpop.f32.mrb[0].mxu0
    %v1269 = vadd.f32 0.0, %v1268
    %v1270 = vpop.f32.mrb[0].mxu0
    %1271 = vmatprep.mubr.bf16.mxu0 0
    %1272 = vmatmul.mubr.bf16.gmra.mrb[0].mxu0 %v1201
    %v1273 = vpop.f32.mrb[0].mxu0
    %v1274 = vadd.f32 0.0, %v1273
    %v1275 = vpop.f32.mrb[0].mxu0
    %v1276 = vpop.f32.mrb[0].mxu0
    %v1277 = vadd.f32 0.0, %v1276
    %v1278 = vpop.f32.mrb[0].mxu0
    %1279 = vmatprep.mubr.bf16.mxu0 0
    %1280 = vmatmul.mubr.bf16.gmra.mrb[0].mxu0 %v1204
    %v1281 = vpop.f32.mrb[0].mxu0
    %v1282 = vadd.f32 0.0, %v1281
    %v1283 = vpop.f32.mrb[0].mxu0
    %v1284 = vpop.f32.mrb[0].mxu0
    %v1285 = vadd.f32 0.0, %v1284
    %v1286 = vpop.f32.mrb[0].mxu0
    %1287 = vmatprep.mubr.bf16.mxu0 0
    %1288 = vmatmul.mubr.bf16.gmra.mrb[0].mxu0 %v1207
    %v1289 = vpop.f32.mrb[0].mxu0
    %v1290 = vadd.f32 0.0, %v1289
    %v1291 = vpop.f32.mrb[0].mxu0
    %v1292 = vpop.f32.mrb[0].mxu0
    %v1293 = vadd.f32 0.0, %v1292
    %v1294 = vpop.f32.mrb[0].mxu0
    %1295 = vmatprep.mubr.bf16.mxu0 0
    %1296 = vmatmul.mubr.bf16.gmra.mrb[0].mxu0 %v1210
    %v1297 = vpop.f32.mrb[0].mxu0
    %v1298 = vadd.f32 0.0, %v1297
    %v1299 = vpop.f32.mrb[0].mxu0
    %v1300 = vpop.f32.mrb[0].mxu0
    %v1301 = vadd.f32 0.0, %v1300
    %v1302 = vpop.f32.mrb[0].mxu0
    %1303 = vmatprep.mubr.bf16.mxu0 0
    %1304 = vmatmul.mubr.bf16.gmra.mrb[0].mxu0 %v1213
    %v1305 = vpop.f32.mrb[0].mxu0
    %v1306 = vadd.f32 0.0, %v1305
    %v1307 = vpop.f32.mrb[0].mxu0
    %v1308 = vpop.f32.mrb[0].mxu0
    %v1309 = vadd.f32 0.0, %v1308
    %v1310 = vpop.f32.mrb[0].mxu0
    %1311 = vdwg.mxu0
    %v1312 = vld [vmem:[%s5] sm:$0x1]
    %v1313 = vld [vmem:[%s6] sm:$0x1]
    %vm1314 = vcmask 523264
    %v1315 = vsel %vm1314, %v1250, 0.0
    %v1316 = vsel %vm1314, %v1253, 0.0
    %v1317 = vadd.f32 %v1315, %v1316
    %v1318 = vsel %vm1314, %v1258, 0.0
    %v1319 = vadd.f32 %v1317, %v1318
    %v1320 = vsel %vm1314, %v1261, 0.0
    %v1321 = vadd.f32 %v1319, %v1320
    %v1322 = vsel %vm1314, %v1266, 0.0
    %v1323 = vadd.f32 %v1321, %v1322
    %v1324 = vsel %vm1314, %v1269, 0.0
    %v1325 = vadd.f32 %v1323, %v1324
    %v1326 = vsel %vm1314, %v1274, 0.0
    %v1327 = vadd.f32 %v1325, %v1326
    %v1328 = vsel %vm1314, %v1277, 0.0
    %v1329 = vadd.f32 %v1327, %v1328
    %v1330 = vsel %vm1314, %v1282, 0.0
    %v1331 = vadd.f32 %v1329, %v1330
    %v1332 = vsel %vm1314, %v1285, 0.0
    %v1333 = vadd.f32 %v1331, %v1332
    %v1334 = vsel %vm1314, %v1290, 0.0
    %v1335 = vadd.f32 %v1333, %v1334
    %v1336 = vsel %vm1314, %v1293, 0.0
    %v1337 = vadd.f32 %v1335, %v1336
    %v1338 = vsel %vm1314, %v1298, 0.0
    %v1339 = vadd.f32 %v1337, %v1338
    %v1340 = vsel %vm1314, %v1301, 0.0
    %v1341 = vadd.f32 %v1339, %v1340
    %v1342 = vsel %vm1314, %v1306, 0.0
    %v1343 = vadd.f32 %v1341, %v1342
    %v1344 = vsel %vm1314, %v1309, 0.0
    %v1345 = vadd.f32 %v1343, %v1344
    %v1346 = vrot.slane %v1345, 4
    %v1347 = vadd.f32 %v1345, %v1346
    %v1348 = vrot.slane %v1347, 2
    %v1349 = vadd.f32 %v1347, %v1348
    %v1350 = vrot.slane %v1349, 1
    %v1351 = vadd.f32 %v1349, %v1350
    %v1352 = vrcp.pop 128.0
    %v1353 = vmul.f32 %v1351, %v1352
    %v1354 = vsub.f32 %v1250, %v1353
    %v1355 = vsub.f32 %v1253, %v1353
    %v1356 = vsub.f32 %v1258, %v1353
    %v1357 = vsub.f32 %v1261, %v1353
    %v1358 = vsub.f32 %v1266, %v1353
    %v1359 = vsub.f32 %v1269, %v1353
    %v1360 = vsub.f32 %v1274, %v1353
    %v1361 = vsub.f32 %v1277, %v1353
    %v1362 = vsub.f32 %v1282, %v1353
    %v1363 = vsub.f32 %v1285, %v1353
    %v1364 = vsub.f32 %v1290, %v1353
    %v1365 = vsub.f32 %v1293, %v1353
    %v1366 = vsub.f32 %v1298, %v1353
    %v1367 = vsub.f32 %v1301, %v1353
    %v1368 = vsub.f32 %v1306, %v1353
    %v1369 = vsub.f32 %v1309, %v1353
    %v1370 = vmul.f32 %v1354, %v1354
    %v1371 = vmul.f32 %v1355, %v1355
    %v1372 = vmul.f32 %v1356, %v1356
    %v1373 = vmul.f32 %v1357, %v1357
    %v1374 = vmul.f32 %v1358, %v1358
    %v1375 = vmul.f32 %v1359, %v1359
    %v1376 = vmul.f32 %v1360, %v1360
    %v1377 = vmul.f32 %v1361, %v1361
    %v1378 = vmul.f32 %v1362, %v1362
    %v1379 = vmul.f32 %v1363, %v1363
    %v1380 = vmul.f32 %v1364, %v1364
    %v1381 = vmul.f32 %v1365, %v1365
    %v1382 = vmul.f32 %v1366, %v1366
    %v1383 = vmul.f32 %v1367, %v1367
    %v1384 = vmul.f32 %v1368, %v1368
    %v1385 = vmul.f32 %v1369, %v1369
    %v1386 = vsel %vm1314, %v1370, 0.0
    %v1387 = vsel %vm1314, %v1371, 0.0
    %v1388 = vadd.f32 %v1386, %v1387
    %v1389 = vsel %vm1314, %v1372, 0.0
    %v1390 = vadd.f32 %v1388, %v1389
    %v1391 = vsel %vm1314, %v1373, 0.0
    %v1392 = vadd.f32 %v1390, %v1391
    %v1393 = vsel %vm1314, %v1374, 0.0
    %v1394 = vadd.f32 %v1392, %v1393
    %v1395 = vsel %vm1314, %v1375, 0.0
    %v1396 = vadd.f32 %v1394, %v1395
    %v1397 = vsel %vm1314, %v1376, 0.0
    %v1398 = vadd.f32 %v1396, %v1397
    %v1399 = vsel %vm1314, %v1377, 0.0
    %v1400 = vadd.f32 %v1398, %v1399
    %v1401 = vsel %vm1314, %v1378, 0.0
    %v1402 = vadd.f32 %v1400, %v1401
    %v1403 = vsel %vm1314, %v1379, 0.0
    %v1404 = vadd.f32 %v1402, %v1403
    %v1405 = vsel %vm1314, %v1380, 0.0
    %v1406 = vadd.f32 %v1404, %v1405
    %v1407 = vsel %vm1314, %v1381, 0.0
    %v1408 = vadd.f32 %v1406, %v1407
    %v1409 = vsel %vm1314, %v1382, 0.0
    %v1410 = vadd.f32 %v1408, %v1409
    %v1411 = vsel %vm1314, %v1383, 0.0
    %v1412 = vadd.f32 %v1410, %v1411
    %v1413 = vsel %vm1314, %v1384, 0.0
    %v1414 = vadd.f32 %v1412, %v1413
    %v1415 = vsel %vm1314, %v1385, 0.0
    %v1416 = vadd.f32 %v1414, %v1415
    %v1417 = vrot.slane %v1416, 4
    %v1418 = vadd.f32 %v1416, %v1417
    %v1419 = vrot.slane %v1418, 2
    %v1420 = vadd.f32 %v1418, %v1419
    %v1421 = vrot.slane %v1420, 1
    %v1422 = vadd.f32 %v1420, %v1421
    %v1423 = vmul.f32 %v1422, %v1352
    %v1424 = vadd.f32 %v1423, 1e-05
    %v1425 = vrsqrt.pop %v1424
    %v1426 = vmul.f32 %v1354, %v1425
    %v1427 = vmul.f32 %v1355, %v1425
    %v1428 = vmul.f32 %v1356, %v1425
    %v1429 = vmul.f32 %v1357, %v1425
    %v1431 = vlaneseq
    %v1432 = vshrl.u32 %v1431, 7
    %v1433 = vsub.s32 0, %v1432
    %v1434 = vrot.slane %v1312, %v1433
    %v1436 = vmul.f32 %v1426, %v1434
    %v1437 = vmul.f32 %v1427, %v1434
    %v1438 = vmul.f32 %v1428, %v1434
    %v1439 = vmul.f32 %v1429, %v1434
    %v1441 = vlaneseq
    %v1442 = vshrl.u32 %v1441, 7
    %v1443 = vsub.s32 0, %v1442
    %v1444 = vrot.slane %v1313, %v1443
    %v1446 = vadd.f32 %v1436, %v1444
    %v1447 = vadd.f32 %v1437, %v1444
    %v1448 = vadd.f32 %v1438, %v1444
    %v1449 = vadd.f32 %v1439, %v1444
    %v1450 = vmax.f32 %v1446, 0.0
    %v1451 = vmax.f32 %v1447, 0.0
    %v1452 = vmax.f32 %v1448, 0.0
    %v1453 = vmax.f32 %v1449, 0.0
    %v1454 = vpack.c.bf16 %v1451, %v1450
    %v1455 = vpack.c.bf16 %v1453, %v1452
    %v1456 = vld [vmem:[%s7] sm:$0xf]
    %v1457 = vld [vmem:[%s7 + $0x4] sm:$0xf]
    %v1458 = vld [vmem:[%s7 + $0x8] sm:$0xf]
    %v1459 = vld [vmem:[%s7 + $0xc] sm:$0xf]
    %v1460 = vld [vmem:[%s7 + $0x10] sm:$0xf]
    %v1461 = vld [vmem:[%s7 + $0x14] sm:$0xf]
    %v1462 = vld [vmem:[%s7 + $0x18] sm:$0xf]
    %v1463 = vld [vmem:[%s7 + $0x1c] sm:$0xf]
    %v1472 = vunpack.c.l.b16 %v1456
    %v1473 = vunpack.c.l.b16 %v1457
    %v1474 = vunpack.c.l.b16 %v1458
    %v1475 = vunpack.c.l.b16 %v1459
    %v1476 = vunpack.c.l.b16 %v1460
    %v1477 = vunpack.c.l.b16 %v1461
    %v1478 = vunpack.c.l.b16 %v1462
    %v1479 = vunpack.c.l.b16 %v1463
    %v1480 = vpack.c.b16 %v1473, %v1472
    %v1481 = vpack.c.b16 %v1475, %v1474
    %v1482 = vpack.c.b16 %v1477, %v1476
    %v1483 = vpack.c.b16 %v1479, %v1478
    %v1489 = vsel %vm1314, %v1454, 0
    %v1492 = vsel %vm1314, %v1455, 0
    %1494 = vmatprep.subr.bf16.mxu0 0
    %1495 = vmatpush1.bf16.msra.mxu0 %v1480
    %1496 = vmatprep.subr.bf16.mxu0 0
    %1497 = vmatpush1.bf16.msra.mxu0 %v1481
    %1498 = vmatprep.subr.bf16.mxu0 0
    %1499 = vmatpush1.bf16.msra.mxu0 %v1482
    %1500 = vmatprep.subr.bf16.mxu0 0
    %1501 = vmatpush1.bf16.msra.mxu0 %v1483
    %1502 = vmatprep.subr.bf16.mxu0 0
    %1503 = vmatpush1.bf16.msra.mxu0 0
    %1504 = vmatprep.subr.bf16.mxu0 0
    %1505 = vmatpush1.bf16.msra.mxu0 0
    %1506 = vmatprep.subr.bf16.mxu0 0
    %1507 = vmatpush1.bf16.msra.mxu0 0
    %1508 = vmatprep.subr.bf16.mxu0 0
    %1509 = vmatpush1.bf16.msra.mxu0 0
    %1510 = vmatprep.subr.bf16.mxu0 0
    %1511 = vmatpush1.bf16.msra.mxu0 0
    %1512 = vmatprep.subr.bf16.mxu0 0
    %1513 = vmatpush1.bf16.msra.mxu0 0
    %1514 = vmatprep.subr.bf16.mxu0 0
    %1515 = vmatpush1.bf16.msra.mxu0 0
    %1516 = vmatprep.subr.bf16.mxu0 0
    %1517 = vmatpush1.bf16.msra.mxu0 0
    %1518 = vmatprep.subr.bf16.mxu0 0
    %1519 = vmatpush1.bf16.msra.mxu0 0
    %1520 = vmatprep.subr.bf16.mxu0 0
    %1521 = vmatpush1.bf16.msra.mxu0 0
    %1522 = vmatprep.subr.bf16.mxu0 0
    %1523 = vmatpush1.bf16.msra.mxu0 0
    %1524 = vmatprep.subr.bf16.mxu0 0
    %1525 = vmatpush1.bf16.msra.mxu0 0
    %1526 = vmatprep.mubr.bf16.mxu0 0
    %1527 = vmatmul.mubr.bf16.gmra.mrb[0].mxu0 %v1489
    %v1528 = vpop.f32.mrb[0].mxu0
    %v1529 = vadd.f32 0.0, %v1528
    %v1530 = vpop.f32.mrb[0].mxu0
    %v1531 = vpop.f32.mrb[0].mxu0
    %v1532 = vadd.f32 0.0, %v1531
    %v1533 = vpop.f32.mrb[0].mxu0
    %1534 = vmatprep.mubr.bf16.mxu0 0
    %1535 = vmatmul.mubr.bf16.gmra.mrb[0].mxu0 %v1492
    %v1536 = vpop.f32.mrb[0].mxu0
    %v1537 = vadd.f32 0.0, %v1536
    %v1538 = vpop.f32.mrb[0].mxu0
    %v1539 = vpop.f32.mrb[0].mxu0
    %v1540 = vadd.f32 0.0, %v1539
    %v1541 = vpop.f32.mrb[0].mxu0
    %1542 = vdwg.mxu0
    %v1543 = vld [vmem:[%s8] sm:$0x1]
    %v1544 = vld [vmem:[%s9] sm:$0x1]
    %v1545 = vadd.f32 %v1529, %v1532
    %v1546 = vadd.f32 %v1545, %v1537
    %v1547 = vadd.f32 %v1546, %v1540
    %v1548 = vrot.slane %v1547, 4
    %v1549 = vadd.f32 %v1547, %v1548
    %v1550 = vrot.slane %v1549, 2
    %v1551 = vadd.f32 %v1549, %v1550
    %v1552 = vrot.slane %v1551, 1
    %v1553 = vadd.f32 %v1551, %v1552
    %v1554 = vrcp.pop 32.0
    %v1555 = vmul.f32 %v1553, %v1554
    %v1556 = vsub.f32 %v1529, %v1555
    %v1557 = vsub.f32 %v1532, %v1555
    %v1558 = vsub.f32 %v1537, %v1555
    %v1559 = vsub.f32 %v1540, %v1555
    %v1560 = vmul.f32 %v1556, %v1556
    %v1561 = vmul.f32 %v1557, %v1557
    %v1562 = vmul.f32 %v1558, %v1558
    %v1563 = vmul.f32 %v1559, %v1559
    %v1564 = vadd.f32 %v1560, %v1561
    %v1565 = vadd.f32 %v1564, %v1562
    %v1566 = vadd.f32 %v1565, %v1563
    %v1567 = vrot.slane %v1566, 4
    %v1568 = vadd.f32 %v1566, %v1567
    %v1569 = vrot.slane %v1568, 2
    %v1570 = vadd.f32 %v1568, %v1569
    %v1571 = vrot.slane %v1570, 1
    %v1572 = vadd.f32 %v1570, %v1571
    %v1573 = vmul.f32 %v1572, %v1554
    %v1574 = vadd.f32 %v1573, 1e-05
    %v1575 = vrsqrt.pop %v1574
    %v1576 = vmul.f32 %v1556, %v1575
    %v1577 = vmul.f32 %v1557, %v1575
    %v1578 = vmul.f32 %v1558, %v1575
    %v1579 = vmul.f32 %v1559, %v1575
    %v1581 = vlaneseq
    %v1582 = vshrl.u32 %v1581, 7
    %v1583 = vsub.s32 0, %v1582
    %v1584 = vrot.slane %v1543, %v1583
    %v1586 = vmul.f32 %v1576, %v1584
    %v1587 = vmul.f32 %v1577, %v1584
    %v1588 = vmul.f32 %v1578, %v1584
    %v1589 = vmul.f32 %v1579, %v1584
    %v1591 = vlaneseq
    %v1592 = vshrl.u32 %v1591, 7
    %v1593 = vsub.s32 0, %v1592
    %v1594 = vrot.slane %v1544, %v1593
    %v1596 = vadd.f32 %v1586, %v1594
    %v1597 = vadd.f32 %v1587, %v1594
    %v1598 = vadd.f32 %v1588, %v1594
    %v1599 = vadd.f32 %v1589, %v1594
    %v1600 = vmax.f32 %v1596, 0.0
    %v1601 = vmax.f32 %v1597, 0.0
    %v1602 = vmax.f32 %v1598, 0.0
    %v1603 = vmax.f32 %v1599, 0.0
    %v1604 = vadd.f32 %v1600, %v1601
    %v1605 = vrot.slane %v1604, 4
    %v1606 = vadd.f32 %v1604, %v1605
    %v1607 = vrot.slane %v1606, 2
    %v1608 = vadd.f32 %v1606, %v1607
    %v1609 = vrot.slane %v1608, 1
    %v1610 = vadd.f32 %v1608, %v1609
    %v1611 = vadd.f32 %v1602, %v1603
    %v1612 = vrot.slane %v1611, 4
    %v1613 = vadd.f32 %v1611, %v1612
    %v1614 = vrot.slane %v1613, 2
    %v1615 = vadd.f32 %v1613, %v1614
    %v1616 = vrot.slane %v1615, 1
    %v1617 = vadd.f32 %v1615, %v1616
    %v1618 = vrcp.pop 16.0
    %v1619 = vmul.f32 %v1610, %v1618
    %v1620 = vmul.f32 %v1617, %v1618
    %v1621 = vsub.f32 %v1600, %v1619
    %v1622 = vsub.f32 %v1601, %v1619
    %v1623 = vsub.f32 %v1602, %v1620
    %v1624 = vsub.f32 %v1603, %v1620
    %v1625 = vmul.f32 %v1621, %v1621
    %v1626 = vmul.f32 %v1622, %v1622
    %v1627 = vmul.f32 %v1623, %v1623
    %v1628 = vmul.f32 %v1624, %v1624
    %v1629 = vadd.f32 %v1625, %v1626
    %v1630 = vrot.slane %v1629, 4
    %v1631 = vadd.f32 %v1629, %v1630
    %v1632 = vrot.slane %v1631, 2
    %v1633 = vadd.f32 %v1631, %v1632
    %v1634 = vrot.slane %v1633, 1
    %v1635 = vadd.f32 %v1633, %v1634
    %v1636 = vadd.f32 %v1627, %v1628
    %v1637 = vrot.slane %v1636, 4
    %v1638 = vadd.f32 %v1636, %v1637
    %v1639 = vrot.slane %v1638, 2
    %v1640 = vadd.f32 %v1638, %v1639
    %v1641 = vrot.slane %v1640, 1
    %v1642 = vadd.f32 %v1640, %v1641
    %v1643 = vmul.f32 %v1635, %v1618
    %v1644 = vmul.f32 %v1642, %v1618
    %v1645 = vld [vmem:[%s10] sm:$0xf]
    %v1646 = vld [vmem:[%s11] sm:$0xff]
    %v1647 = vld [vmem:[%s11 + $0x8] sm:$0xff]
    %v1648 = vld [vmem:[%s11 + $0x10] sm:$0xff]
    %v1649 = vld [vmem:[%s11 + $0x18] sm:$0xff]
    %v1650 = vld [vmem:[%s11 + $0x20] sm:$0xff]
    %v1651 = vld [vmem:[%s11 + $0x28] sm:$0xff]
    %v1652 = vld [vmem:[%s11 + $0x30] sm:$0xff]
    %v1653 = vld [vmem:[%s11 + $0x38] sm:$0xff]
    %v1654 = vld [vmem:[%s11 + $0x40] sm:$0xff]
    %v1655 = vld [vmem:[%s11 + $0x48] sm:$0xff]
    %v1656 = vld [vmem:[%s11 + $0x50] sm:$0xff]
    %v1657 = vld [vmem:[%s11 + $0x58] sm:$0xff]
    %v1658 = vld [vmem:[%s11 + $0x60] sm:$0xff]
    %v1659 = vld [vmem:[%s11 + $0x68] sm:$0xff]
    %v1660 = vld [vmem:[%s11 + $0x70] sm:$0xff]
    %v1661 = vld [vmem:[%s11 + $0x78] sm:$0xff]
    %v1662 = vld [vmem:[%s11 + $0x80] sm:$0xff]
    %v1663 = vld [vmem:[%s11 + $0x88] sm:$0xff]
    %v1664 = vld [vmem:[%s11 + $0x90] sm:$0xff]
    %v1665 = vld [vmem:[%s11 + $0x98] sm:$0xff]
    %v1666 = vld [vmem:[%s11 + $0xa0] sm:$0xff]
    %v1667 = vld [vmem:[%s11 + $0xa8] sm:$0xff]
    %v1668 = vld [vmem:[%s11 + $0xb0] sm:$0xff]
    %v1669 = vld [vmem:[%s11 + $0xb8] sm:$0xff]
    %v1670 = vld [vmem:[%s11 + $0xc0] sm:$0xff]
    %v1671 = vld [vmem:[%s11 + $0xc8] sm:$0xff]
    %v1672 = vld [vmem:[%s11 + $0xd0] sm:$0xff]
    %v1673 = vld [vmem:[%s11 + $0xd8] sm:$0xff]
    %v1674 = vld [vmem:[%s11 + $0xe0] sm:$0xff]
    %v1675 = vld [vmem:[%s11 + $0xe8] sm:$0xff]
    %v1676 = vld [vmem:[%s11 + $0xf0] sm:$0xff]
    %v1677 = vld [vmem:[%s11 + $0xf8] sm:$0xff]
    %v1680 = vunpack.c.l.s4 1983009808
    %v1681 = vunpack.c.0.s8 %v1680
    %v1682 = vlaneseq
    %v1683 = vshrl.u32 %v1682, 7
    %v1684 = vsub.s32 %v1681, %v1683
    %v1685 = vrot.slane %v1645, %v1684
    %v1686 = vcombine.high %v1685, %v1685
    %1689 = vmatprep.subr.mxu0 0.0
    %1690 = vmatpush1.msra.mxu0 %v1646
    %1691 = vmatprep.subr.mxu0 0.0
    %1692 = vmatpush1.msra.mxu0 %v1647
    %1693 = vmatprep.subr.mxu0 0.0
    %1694 = vmatpush1.msra.mxu0 %v1648
    %1695 = vmatprep.subr.mxu0 0.0
    %1696 = vmatpush1.msra.mxu0 %v1649
    %1697 = vmatprep.subr.mxu0 0.0
    %1698 = vmatpush1.msra.mxu0 %v1650
    %1699 = vmatprep.subr.mxu0 0.0
    %1700 = vmatpush1.msra.mxu0 %v1651
    %1701 = vmatprep.subr.mxu0 0.0
    %1702 = vmatpush1.msra.mxu0 %v1652
    %1703 = vmatprep.subr.mxu0 0.0
    %1704 = vmatpush1.msra.mxu0 %v1653
    %1705 = vmatprep.subr.mxu0 0.0
    %1706 = vmatpush1.msra.mxu0 %v1654
    %1707 = vmatprep.subr.mxu0 0.0
    %1708 = vmatpush1.msra.mxu0 %v1655
    %1709 = vmatprep.subr.mxu0 0.0
    %1710 = vmatpush1.msra.mxu0 %v1656
    %1711 = vmatprep.subr.mxu0 0.0
    %1712 = vmatpush1.msra.mxu0 %v1657
    %1713 = vmatprep.subr.mxu0 0.0
    %1714 = vmatpush1.msra.mxu0 %v1658
    %1715 = vmatprep.subr.mxu0 0.0
    %1716 = vmatpush1.msra.mxu0 %v1659
    %1717 = vmatprep.subr.mxu0 0.0
    %1718 = vmatpush1.msra.mxu0 %v1660
    %1719 = vmatprep.subr.mxu0 0.0
    %1720 = vmatpush1.msra.mxu0 %v1661
    %1721 = vmatprep.subr.mxu0 0.0
    %1722 = vmatpush1.msra.mxu0 %v1662
    %1723 = vmatprep.subr.mxu0 0.0
    %1724 = vmatpush1.msra.mxu0 %v1663
    %1725 = vmatprep.subr.mxu0 0.0
    %1726 = vmatpush1.msra.mxu0 %v1664
    %1727 = vmatprep.subr.mxu0 0.0
    %1728 = vmatpush1.msra.mxu0 %v1665
    %1729 = vmatprep.subr.mxu0 0.0
    %1730 = vmatpush1.msra.mxu0 %v1666
    %1731 = vmatprep.subr.mxu0 0.0
    %1732 = vmatpush1.msra.mxu0 %v1667
    %1733 = vmatprep.subr.mxu0 0.0
    %1734 = vmatpush1.msra.mxu0 %v1668
    %1735 = vmatprep.subr.mxu0 0.0
    %1736 = vmatpush1.msra.mxu0 %v1669
    %1737 = vmatprep.subr.mxu0 0.0
    %1738 = vmatpush1.msra.mxu0 %v1670
    %1739 = vmatprep.subr.mxu0 0.0
    %1740 = vmatpush1.msra.mxu0 %v1671
    %1741 = vmatprep.subr.mxu0 0.0
    %1742 = vmatpush1.msra.mxu0 %v1672
    %1743 = vmatprep.subr.mxu0 0.0
    %1744 = vmatpush1.msra.mxu0 %v1673
    %1745 = vmatprep.subr.mxu0 0.0
    %1746 = vmatpush1.msra.mxu0 %v1674
    %1747 = vmatprep.subr.mxu0 0.0
    %1748 = vmatpush1.msra.mxu0 %v1675
    %1749 = vmatprep.subr.mxu0 0.0
    %1750 = vmatpush1.msra.mxu0 %v1676
    %1751 = vmatprep.subr.mxu0 0.0
    %1752 = vmatpush1.msra.mxu0 %v1677
    %1753 = vmatprep.mubr.f32.mxu0 %v1686
    %1754 = vmatmul.mubr.f32.gmra.mrb[0].mxu0 %v1685
    %v1755 = vpop.f32.mrb[0].mxu0
    %v1756 = vadd.f32 0.0, %v1755
    %v1757 = vpop.f32.mrb[0].mxu0
    %1758 = vdwg.mxu0
    %v1759 = vld [vmem:[%s12] sm:$0xff]
    %v1760 = vld [vmem:[%s12 + $0x8] sm:$0xff]
    %v1761 = vld [vmem:[%s12 + $0x10] sm:$0xff]
    %v1762 = vld [vmem:[%s12 + $0x18] sm:$0xff]
    %v1763 = vld [vmem:[%s12 + $0x20] sm:$0xff]
    %v1764 = vld [vmem:[%s12 + $0x28] sm:$0xff]
    %v1765 = vld [vmem:[%s12 + $0x30] sm:$0xff]
    %v1766 = vld [vmem:[%s12 + $0x38] sm:$0xff]
    %v1767 = vld [vmem:[%s12 + $0x40] sm:$0xff]
    %v1768 = vld [vmem:[%s12 + $0x48] sm:$0xff]
    %v1769 = vld [vmem:[%s12 + $0x50] sm:$0xff]
    %v1770 = vld [vmem:[%s12 + $0x58] sm:$0xff]
    %v1771 = vld [vmem:[%s12 + $0x60] sm:$0xff]
    %v1772 = vld [vmem:[%s12 + $0x68] sm:$0xff]
    %v1773 = vld [vmem:[%s12 + $0x70] sm:$0xff]
    %v1774 = vld [vmem:[%s12 + $0x78] sm:$0xff]
    %v1775 = vld [vmem:[%s13] sm:$0x1]
    %v1777 = vlaneseq
    %v1778 = vshrl.u32 %v1777, 7
    %v1779 = vsub.s32 0, %v1778
    %v1780 = vrot.slane %v1775, %v1779
    %vm1784 = vcmask 1041409
    %v1785 = vsel %vm1784, %v1644, %v1643
    %1787 = vmatprep.subr.mxu0 0.0
    %1788 = vmatpush1.msra.mxu0 %v1759
    %1789 = vmatprep.subr.mxu0 0.0
    %1790 = vmatpush1.msra.mxu0 %v1760
    %1791 = vmatprep.subr.mxu0 0.0
    %1792 = vmatpush1.msra.mxu0 %v1761
    %1793 = vmatprep.subr.mxu0 0.0
    %1794 = vmatpush1.msra.mxu0 %v1762
    %1795 = vmatprep.subr.mxu0 0.0
    %1796 = vmatpush1.msra.mxu0 %v1763
    %1797 = vmatprep.subr.mxu0 0.0
    %1798 = vmatpush1.msra.mxu0 %v1764
    %1799 = vmatprep.subr.mxu0 0.0
    %1800 = vmatpush1.msra.mxu0 %v1765
    %1801 = vmatprep.subr.mxu0 0.0
    %1802 = vmatpush1.msra.mxu0 %v1766
    %1803 = vmatprep.subr.mxu0 0.0
    %1804 = vmatpush1.msra.mxu0 %v1767
    %1805 = vmatprep.subr.mxu0 0.0
    %1806 = vmatpush1.msra.mxu0 %v1768
    %1807 = vmatprep.subr.mxu0 0.0
    %1808 = vmatpush1.msra.mxu0 %v1769
    %1809 = vmatprep.subr.mxu0 0.0
    %1810 = vmatpush1.msra.mxu0 %v1770
    %1811 = vmatprep.subr.mxu0 0.0
    %1812 = vmatpush1.msra.mxu0 %v1771
    %1813 = vmatprep.subr.mxu0 0.0
    %1814 = vmatpush1.msra.mxu0 %v1772
    %1815 = vmatprep.subr.mxu0 0.0
    %1816 = vmatpush1.msra.mxu0 %v1773
    %1817 = vmatprep.subr.mxu0 0.0
    %1818 = vmatpush1.msra.mxu0 %v1774
    %1819 = vmatprep.subr.mxu0 0.0
    %1820 = vmatpush1.msra.mxu0 0.0
    %1821 = vmatprep.subr.mxu0 0.0
    %1822 = vmatpush1.msra.mxu0 0.0
    %1823 = vmatprep.subr.mxu0 0.0
    %1824 = vmatpush1.msra.mxu0 0.0
    %1825 = vmatprep.subr.mxu0 0.0
    %1826 = vmatpush1.msra.mxu0 0.0
    %1827 = vmatprep.subr.mxu0 0.0
    %1828 = vmatpush1.msra.mxu0 0.0
    %1829 = vmatprep.subr.mxu0 0.0
    %1830 = vmatpush1.msra.mxu0 0.0
    %1831 = vmatprep.subr.mxu0 0.0
    %1832 = vmatpush1.msra.mxu0 0.0
    %1833 = vmatprep.subr.mxu0 0.0
    %1834 = vmatpush1.msra.mxu0 0.0
    %1835 = vmatprep.subr.mxu0 0.0
    %1836 = vmatpush1.msra.mxu0 0.0
    %1837 = vmatprep.subr.mxu0 0.0
    %1838 = vmatpush1.msra.mxu0 0.0
    %1839 = vmatprep.subr.mxu0 0.0
    %1840 = vmatpush1.msra.mxu0 0.0
    %1841 = vmatprep.subr.mxu0 0.0
    %1842 = vmatpush1.msra.mxu0 0.0
    %1843 = vmatprep.subr.mxu0 0.0
    %1844 = vmatpush1.msra.mxu0 0.0
    %1845 = vmatprep.subr.mxu0 0.0
    %1846 = vmatpush1.msra.mxu0 0.0
    %1847 = vmatprep.subr.mxu0 0.0
    %1848 = vmatpush1.msra.mxu0 0.0
    %1849 = vmatprep.subr.mxu0 0.0
    %1850 = vmatpush1.msra.mxu0 0.0
    %1851 = vmatprep.mubr.f32.mxu0 0.0
    %1852 = vmatmul.mubr.f32.gmra.mrb[0].mxu0 %v1785
    %v1853 = vpop.f32.mrb[0].mxu0
    %v1854 = vadd.f32 %v1780, %v1853
    %v1855 = vpop.f32.mrb[0].mxu0
    %1856 = vdwg.mxu0
    %v1859 = vunpack.c.l.s4 1966171168
    %v1860 = vunpack.c.0.s8 %v1859
    %v1861 = vlaneseq
    %v1862 = vshrl.u32 %v1861, 7
    %v1863 = vsub.s32 %v1860, %v1862
    %v1864 = vrot.slane %v1756, %v1863
    %v1865 = vcombine.high %v1864, %v1864
    %v1867 = vunpack.c.l.s4 1966171168
    %v1868 = vunpack.c.0.s8 %v1867
    %v1869 = vlaneseq
    %v1870 = vshrl.u32 %v1869, 7
    %v1871 = vsub.s32 %v1868, %v1870
    %v1872 = vrot.slane %v1864, %v1871
    %v1874 = vunpack.c.l.s4 1966171168
    %v1875 = vunpack.c.0.s8 %v1874
    %v1876 = vlaneseq
    %v1877 = vshrl.u32 %v1876, 7
    %v1878 = vsub.s32 %v1875, %v1877
    %v1879 = vrot.slane %v1865, %v1878
    %v1880 = vlaneseq
    %v1881 = vshrl.u32 %v1880, 7
    %v1882 = vsub.s32 0, %v1881
    %v1883 = vrot.slane %v1872, %v1882
    %v1884 = vlaneseq
    %v1885 = vshrl.u32 %v1884, 7
    %v1886 = vsub.s32 0, %v1885
    %v1887 = vrot.slane %v1879, %v1886
    %v1890 = vadd.f32 %v1883, %v1854
    %v1891 = vadd.f32 %v1887, %v1854
    %v1892 = vmax.f32 %v1890, 0.0
    %v1893 = vmax.f32 %v1891, 0.0
    %vm1894 = vcmask 1041408
    %v1895 = vsel %vm1894, %v1892, 0.0
    %v1896 = vrot.slane %v1895, 4
    %v1897 = vadd.f32 %v1895, %v1896
    %v1898 = vrot.slane %v1897, 2
    %v1899 = vadd.f32 %v1897, %v1898
    %v1900 = vrot.slane %v1899, 1
    %v1901 = vadd.f32 %v1899, %v1900
    %v1902 = vsel %vm1894, %v1893, 0.0
    %v1903 = vrot.slane %v1902, 4
    %v1904 = vadd.f32 %v1902, %v1903
    %v1905 = vrot.slane %v1904, 2
    %v1906 = vadd.f32 %v1904, %v1905
    %v1907 = vrot.slane %v1906, 1
    %v1908 = vadd.f32 %v1906, %v1907
    %v1909 = vld [vmem:[%s14] sm:$0xff]
    %v1910 = vld [vmem:[%s14 + $0x8] sm:$0xff]
    %v1911 = vld [vmem:[%s14 + $0x10] sm:$0xff]
    %v1912 = vld [vmem:[%s14 + $0x18] sm:$0xff]
    %v1913 = vld [vmem:[%s14 + $0x20] sm:$0xff]
    %v1914 = vld [vmem:[%s14 + $0x28] sm:$0xff]
    %v1915 = vld [vmem:[%s14 + $0x30] sm:$0xff]
    %v1916 = vld [vmem:[%s14 + $0x38] sm:$0xff]
    %v1917 = vld [vmem:[%s14 + $0x40] sm:$0xff]
    %v1918 = vld [vmem:[%s14 + $0x48] sm:$0xff]
    %v1919 = vld [vmem:[%s14 + $0x50] sm:$0xff]
    %v1920 = vld [vmem:[%s14 + $0x58] sm:$0xff]
    %v1921 = vld [vmem:[%s14 + $0x60] sm:$0xff]
    %v1922 = vld [vmem:[%s14 + $0x68] sm:$0xff]
    %v1923 = vld [vmem:[%s14 + $0x70] sm:$0xff]
    %v1924 = vld [vmem:[%s14 + $0x78] sm:$0xff]
    %v1925 = vld [vmem:[%s15] sm:$0x1]
    %v1926 = vmul.f32 %v1925, 2.0
    %v1928 = vlaneseq
    %v1929 = vshrl.u32 %v1928, 7
    %v1930 = vsub.s32 0, %v1929
    %v1931 = vrot.slane %v1926, %v1930
    %v1935 = vsel %vm1784, %v1908, %v1901
    %1937 = vmatprep.subr.mxu0 0.0
    %1938 = vmatpush1.msra.mxu0 %v1909
    %1939 = vmatprep.subr.mxu0 0.0
    %1940 = vmatpush1.msra.mxu0 %v1910
    %1941 = vmatprep.subr.mxu0 0.0
    %1942 = vmatpush1.msra.mxu0 %v1911
    %1943 = vmatprep.subr.mxu0 0.0
    %1944 = vmatpush1.msra.mxu0 %v1912
    %1945 = vmatprep.subr.mxu0 0.0
    %1946 = vmatpush1.msra.mxu0 %v1913
    %1947 = vmatprep.subr.mxu0 0.0
    %1948 = vmatpush1.msra.mxu0 %v1914
    %1949 = vmatprep.subr.mxu0 0.0
    %1950 = vmatpush1.msra.mxu0 %v1915
    %1951 = vmatprep.subr.mxu0 0.0
    %1952 = vmatpush1.msra.mxu0 %v1916
    %1953 = vmatprep.subr.mxu0 0.0
    %1954 = vmatpush1.msra.mxu0 %v1917
    %1955 = vmatprep.subr.mxu0 0.0
    %1956 = vmatpush1.msra.mxu0 %v1918
    %1957 = vmatprep.subr.mxu0 0.0
    %1958 = vmatpush1.msra.mxu0 %v1919
    %1959 = vmatprep.subr.mxu0 0.0
    %1960 = vmatpush1.msra.mxu0 %v1920
    %1961 = vmatprep.subr.mxu0 0.0
    %1962 = vmatpush1.msra.mxu0 %v1921
    %1963 = vmatprep.subr.mxu0 0.0
    %1964 = vmatpush1.msra.mxu0 %v1922
    %1965 = vmatprep.subr.mxu0 0.0
    %1966 = vmatpush1.msra.mxu0 %v1923
    %1967 = vmatprep.subr.mxu0 0.0
    %1968 = vmatpush1.msra.mxu0 %v1924
    %1969 = vmatprep.subr.mxu0 0.0
    %1970 = vmatpush1.msra.mxu0 0.0
    %1971 = vmatprep.subr.mxu0 0.0
    %1972 = vmatpush1.msra.mxu0 0.0
    %1973 = vmatprep.subr.mxu0 0.0
    %1974 = vmatpush1.msra.mxu0 0.0
    %1975 = vmatprep.subr.mxu0 0.0
    %1976 = vmatpush1.msra.mxu0 0.0
    %1977 = vmatprep.subr.mxu0 0.0
    %1978 = vmatpush1.msra.mxu0 0.0
    %1979 = vmatprep.subr.mxu0 0.0
    %1980 = vmatpush1.msra.mxu0 0.0
    %1981 = vmatprep.subr.mxu0 0.0
    %1982 = vmatpush1.msra.mxu0 0.0
    %1983 = vmatprep.subr.mxu0 0.0
    %1984 = vmatpush1.msra.mxu0 0.0
    %1985 = vmatprep.subr.mxu0 0.0
    %1986 = vmatpush1.msra.mxu0 0.0
    %1987 = vmatprep.subr.mxu0 0.0
    %1988 = vmatpush1.msra.mxu0 0.0
    %1989 = vmatprep.subr.mxu0 0.0
    %1990 = vmatpush1.msra.mxu0 0.0
    %1991 = vmatprep.subr.mxu0 0.0
    %1992 = vmatpush1.msra.mxu0 0.0
    %1993 = vmatprep.subr.mxu0 0.0
    %1994 = vmatpush1.msra.mxu0 0.0
    %1995 = vmatprep.subr.mxu0 0.0
    %1996 = vmatpush1.msra.mxu0 0.0
    %1997 = vmatprep.subr.mxu0 0.0
    %1998 = vmatpush1.msra.mxu0 0.0
    %1999 = vmatprep.subr.mxu0 0.0
    %2000 = vmatpush1.msra.mxu0 0.0
    %2001 = vmatprep.mubr.f32.mxu0 0.0
    %2002 = vmatmul.mubr.f32.gmra.mrb[0].mxu0 %v1935
    %v2003 = vpop.f32.mrb[0].mxu0
    %v2004 = vadd.f32 %v1931, %v2003
    %v2005 = vpop.f32.mrb[0].mxu0
    %2006 = vdwg.mxu0
    %vm2007 = vcmask 58368
    %2008 = vst.msk [vmem:[#allocation2] sm:$0x3] %vm2007, %v2004
    // Predicated region
    $region66: #{fdc_i9_forward.1} parent=1 // pred_check
      _
    $region67: #{fdc_i9_forward.1} parent=1 // pred_check_branch
      %2010 = sbr.rel (0) target = $region69
    $region68: #{fdc_i9_forward.1} parent=1 // pred_region
      %s2012 = ssub.s32 32, 32
      %2013 = vsyncadd [#allocation3], %s2012
      %s2015 = sshll.u32 [#allocation2], 4
      %s2016 = int_to_ptr.vmem [resolvable:$true] %s2015
      %2018 = dma.vmem_to_hbm [thread:$0]  %s2016, 32, %s16, [#allocation3]
    $region69: #{fdc_i9_forward.1} parent=1 // pred_fallthru
      _
    // Predicated region
    $region70: #{fdc_i9_forward.1} parent=1 // pred_check
      _
    $region71: #{fdc_i9_forward.1} parent=1 // pred_check_branch
      %2020 = sbr.rel (0) target = $region73
    $region72: #{fdc_i9_forward.1} parent=1 // pred_region
      %2021 = dma.done [#allocation3], 32
    $region73: #{fdc_i9_forward.1} parent=1 // pred_fallthru
      _
    %2022 = vsyncpa [#allocation3], 1

</llo_original>
